<compile_context>
chip_gen: v7x
topology: tpu7x:2x2x1
jax: 0.10.0
libtpu: 0.0.40
codegen_flags: <defaults>
</compile_context>

<pallas_src>
import math
from functools import partial

import jax
import jax.numpy as jnp
from jax.experimental import pallas as pl
from jax.experimental.pallas import tpu as pltpu


# ---------------------------------------------------------------------------
# Fused kernel: qkv projection + per-head softmax attention + output projection,
# all in VMEM, for one block of Bb batch elements.
# ---------------------------------------------------------------------------
def _attention_kernel(x_ref, wqkv_ref, wproj_ref, bproj_ref, o_ref, attn_buf,
                      *, num_heads):
    Bb, N, C = x_ref.shape
    D = C // num_heads
    M = Bb * N

    # Flatten the batch block to (M, C) rows: free merge of leading dims.
    x2d = x_ref[...].reshape(M, C)                       # bf16

    # Fused qkv projection on the MXU: bf16 operands, f32 accumulation.  Columns
    # are laid out (3, H, D) exactly like torch's reshape; the softmax scale is
    # already folded into the q-columns of the weight (done in the wrapper).
    qkv = jnp.dot(x2d, wqkv_ref[...], preferred_element_type=jnp.float32)
    qkv = qkv.astype(jnp.bfloat16)                       # matmul-operand dtype

    for b in range(Bb):
        r0 = b * N
        for h in range(num_heads):
            c0 = h * D
            q = qkv[r0:r0 + N, c0:c0 + D]                         # (N, D) bf16, pre-scaled
            k = qkv[r0:r0 + N, C + c0:C + c0 + D]                 # (N, D) bf16
            v = qkv[r0:r0 + N, 2 * C + c0:2 * C + c0 + D]         # (N, D) bf16

            # q @ k^T without materializing k.T: contract last dims of both.
            s = jax.lax.dot_general(q, k, (((1,), (1,)), ((), ())),
                                    preferred_element_type=jnp.float32)  # (N, N) f32
            # Softmax statistics stay in f32 (v5e VPU/EUP have no bf16 mode).
            s = s - jnp.max(s, axis=-1, keepdims=True)
            p = jnp.exp(s)
            l = jnp.sum(p, axis=-1, keepdims=True)                # (N, 1) f32

            o_h = jnp.dot(p.astype(jnp.bfloat16), v,
                          preferred_element_type=jnp.float32)     # (N, D) f32
            # Normalize the (N, D) output instead of the (N, N) scores; the
            # approximate reciprocal runs on the otherwise-idle EUP slot.
            o_h = o_h * pl.reciprocal(l, approx=True)

            # Stage this head's output straight into the (M, C) VMEM scratch:
            # bounds vreg liveness to a single head (no H-way lane concat) and
            # keeps the projection a single full-K matmul, lane-dense over C.
            attn_buf[r0:r0 + N, c0:c0 + D] = o_h

    # Output projection (M, C) @ (C, C): bf16 operands, f32 accumulation.
    out = jnp.dot(attn_buf[...].astype(jnp.bfloat16), wproj_ref[...],
                  preferred_element_type=jnp.float32)
    out = out + bproj_ref[...]                                    # (1, C) f32 bias
    o_ref[...] = out.reshape(Bb, N, C).astype(o_ref.dtype)


def attention_forward(x, params, num_heads):
    """x: (B, N, C); params: w_qkv (C,3C), w_proj (C,C), b_proj (C,). qkv_bias=False."""
    B, N, C = x.shape
    D = C // num_heads
    scale = D ** (-0.5)

    # Fold the softmax scale into the q-columns of the qkv weight, then cast all
    # matmul operands (x + weights) to bf16; accumulation stays f32 in-kernel.
    col_scale = jnp.concatenate(
        [jnp.full((C,), scale, jnp.float32), jnp.ones((2 * C,), jnp.float32)])
    w_qkv = (params["w_qkv"].astype(jnp.float32) * col_scale[None, :]).astype(jnp.bfloat16)
    w_proj = params["w_proj"].astype(jnp.bfloat16)                 # (C, C)
    b_proj = params["b_proj"].reshape(1, C).astype(jnp.float32)    # (1, C)
    x_bf = x.astype(jnp.bfloat16)

    # Block several batch elements per grid step so the projection matmuls see
    # Bb*N rows (target >= 256) and per-step overhead is amortized for small N.
    Bb = B
    for cand in range(1, B + 1):
        if B % cand == 0 and cand * N >= 256:
            Bb = cand
            break
    M = Bb * N

    # Per-step VMEM footprint (single-buffered weights, double-buffered x/out,
    # f32+bf16 qkv intermediate, attention scratch, per-head score tiles), with
    # generous headroom -> explicit scoped-VMEM limit (capped for v7x's 64 MiB).
    est = ((C * 3 * C + C * C) * 2 + C * 4            # resident weights + bias
           + 2 * M * C * 2 + 2 * M * C * 4            # x (bf16) + out (f32), dbl-buffered
           + M * 3 * C * (4 + 2) + M * C * 4          # qkv f32+bf16, attn scratch
           + 2 * N * N * 4 + 4 * N * D * 4)           # scores + per-head temporaries
    vmem_limit = int(min(48 * 2 ** 20, max(32 * 2 ** 20, 4 * est)))

    const2 = lambda i: (0, 0)
    kernel = partial(_attention_kernel, num_heads=num_heads)
    return pl.pallas_call(
        kernel,
        out_shape=jax.ShapeDtypeStruct((B, N, C), x.dtype),
        grid=(B // Bb,),
        in_specs=[
            pl.BlockSpec((Bb, N, C), lambda i: (i, 0, 0)),
            # Constant-index weight/bias blocks: single-buffered (no pointless
            # double-buffer DMA/VMEM), resident across the whole grid.
            pl.BlockSpec((C, 3 * C), const2, pipeline_mode=pl.Buffered(1)),
            pl.BlockSpec((C, C), const2, pipeline_mode=pl.Buffered(1)),
            pl.BlockSpec((1, C), const2, pipeline_mode=pl.Buffered(1)),
        ],
        out_specs=pl.BlockSpec((Bb, N, C), lambda i: (i, 0, 0)),
        scratch_shapes=[pltpu.VMEM((M, C), jnp.float32)],
        compiler_params=pltpu.CompilerParams(
            dimension_semantics=("parallel",),        # megacore sharding on v7x
            vmem_limit_bytes=vmem_limit,
        ),
    )(x_bf, w_qkv, w_proj, b_proj)


# ---------------------------------------------------------------------------
# Pure-JAX f32 reference (mirrors the PyTorch forward) for a sanity check
# ---------------------------------------------------------------------------
def attention_reference(x, params, num_heads):
    B, N, C = x.shape
    D = C // num_heads
    scale = D ** (-0.5)
    qkv = (x.reshape(B * N, C) @ params["w_qkv"]).reshape(B, N, 3, num_heads, D)
    qkv = qkv.transpose(2, 0, 3, 1, 4)
    q, k, v = qkv[0], qkv[1], qkv[2]
    attn = jnp.einsum("bhnd,bhmd->bhnm", q, k) * scale
    attn = jax.nn.softmax(attn, axis=-1)
    o = jnp.einsum("bhnm,bhmd->bhnd", attn, v)
    o = o.transpose(0, 2, 1, 3).reshape(B * N, C)
    return (o @ params["w_proj"] + params["b_proj"]).reshape(B, N, C)


if __name__ == "__main__":
    # Small shapes consistent with the module: B=2, N=8 (seq), C=32 (dim), 4 heads.
    B, N, C = 2, 8, 32
    num_heads = 4

    key = jax.random.PRNGKey(0)
    kx, kqkv, kproj, kbp = jax.random.split(key, 4)

    x = jax.random.normal(kx, (B, N, C), dtype=jnp.float32)

    # Deterministic parameter init (Linear weights stored as (in, out) = W.T).
    # qkv_bias=False (module default) -> no qkv bias parameter at all.
    bound = 1.0 / math.sqrt(C)
    params = {
        "w_qkv": jax.random.uniform(
            kqkv, (C, 3 * C), minval=-bound, maxval=bound, dtype=jnp.float32),
        "w_proj": jax.random.uniform(
            kproj, (C, C), minval=-bound, maxval=bound, dtype=jnp.float32),
        "b_proj": jax.random.uniform(
            kbp, (C,), minval=-bound, maxval=bound, dtype=jnp.float32),
    }

    out = jax.block_until_ready(attention_forward(x, params, num_heads))
    ref = attention_reference(x, params, num_heads)

    assert out.shape == (B, N, C)
    # Tolerance covers bf16 MXU operands (rel ~2e-3 per operand) and the EUP
    # approximate reciprocal in the softmax normalization; accumulation is f32.
    err = float(jnp.max(jnp.abs(out - ref)))
    assert jnp.allclose(out, ref, atol=5e-2, rtol=5e-2), f"mismatch vs reference (max abs err {err})"

    print("KERNEL_OK")
</pallas_src>

<mosaic_0001>
module attributes {stable_mosaic.version = 11 : i64} {
  func.func @_attention_kernel(%arg0: i32, %arg1: memref<2x8x32xbf16, #tpu.memory_space<vmem>>, %arg2: memref<32x96xbf16, #tpu.memory_space<vmem>>, %arg3: memref<32x32xbf16, #tpu.memory_space<vmem>>, %arg4: memref<1x32xf32, #tpu.memory_space<vmem>>, %arg5: memref<2x8x32xf32, #tpu.memory_space<vmem>>, %arg6: memref<16x32xf32, #tpu.memory_space<vmem>>) attributes {dimension_semantics = [#tpu.dimension_semantics<parallel>], iteration_bounds = array<i64: 1>, scalar_prefetch = 0 : i64, scratch_operands = 1 : i64, tpu.core_type = #tpu.core_type<tc>, window_params = [{transform_indices = @transform_0, window_bounds = array<i64: 2, 8, 32>}, {pipeline_mode = #tpu.pipeline_mode<synchronous>, transform_indices = @transform_1, window_bounds = array<i64: 32, 96>}, {pipeline_mode = #tpu.pipeline_mode<synchronous>, transform_indices = @transform_2, window_bounds = array<i64: 32, 32>}, {pipeline_mode = #tpu.pipeline_mode<synchronous>, transform_indices = @transform_3, window_bounds = array<i64: 1, 32>}, {transform_indices = @transform_4, window_bounds = array<i64: 2, 8, 32>}]} {
    %c0 = arith.constant 0 : index
    %c0_0 = arith.constant 0 : index
    %c0_1 = arith.constant 0 : index
    %0 = vector.load %arg1[%c0, %c0_0, %c0_1] : memref<2x8x32xbf16, #tpu.memory_space<vmem>>, vector<2x8x32xbf16>
    %1 = vector.shape_cast %0 : vector<2x8x32xbf16> to vector<16x32xbf16>
    %c0_2 = arith.constant 0 : index
    %c0_3 = arith.constant 0 : index
    %2 = vector.load %arg2[%c0_2, %c0_3] : memref<32x96xbf16, #tpu.memory_space<vmem>>, vector<32x96xbf16>
    %cst = arith.constant dense<0.000000e+00> : vector<16x96xf32>
    %3 = tpu.matmul %1, %2, %cst {dimension_numbers = #tpu.dot_dimension_numbers<[1], [0], [0], [1], [0, 0, 1, 1], [], []>} : vector<16x32xbf16>, vector<32x96xbf16>, vector<16x96xf32> -> vector<16x96xf32>
    %4 = arith.truncf %3 : vector<16x96xf32> to vector<16x96xbf16>
    %5 = vector.extract_strided_slice %4 {offsets = [0, 0], sizes = [8, 8], strides = [1, 1]} : vector<16x96xbf16> to vector<8x8xbf16>
    %6 = vector.extract_strided_slice %4 {offsets = [0, 32], sizes = [8, 8], strides = [1, 1]} : vector<16x96xbf16> to vector<8x8xbf16>
    %7 = vector.extract_strided_slice %4 {offsets = [0, 64], sizes = [8, 8], strides = [1, 1]} : vector<16x96xbf16> to vector<8x8xbf16>
    %cst_4 = arith.constant dense<0.000000e+00> : vector<8x8xf32>
    %8 = tpu.matmul %5, %6, %cst_4 {dimension_numbers = #tpu.dot_dimension_numbers<[1], [1], [0], [0], [0, 0, 1, 0], [], []>} : vector<8x8xbf16>, vector<8x8xbf16>, vector<8x8xf32> -> vector<8x8xf32>
    %cst_5 = arith.constant dense<0xFF800000> : vector<8xf32>
    %9 = vector.multi_reduction <maximumf>, %8, %cst_5 [1] : vector<8x8xf32> to vector<8xf32>
    %10 = vector.shape_cast %9 : vector<8xf32> to vector<8x1xf32>
    %11 = vector.broadcast %10 : vector<8x1xf32> to vector<8x8xf32>
    %12 = arith.subf %8, %11 : vector<8x8xf32>
    %13 = math.exp %12 : vector<8x8xf32>
    %cst_6 = arith.constant dense<0.000000e+00> : vector<8xf32>
    %14 = vector.multi_reduction <add>, %13, %cst_6 [1] : vector<8x8xf32> to vector<8xf32>
    %15 = vector.shape_cast %14 : vector<8xf32> to vector<8x1xf32>
    %16 = arith.truncf %13 : vector<8x8xf32> to vector<8x8xbf16>
    %cst_7 = arith.constant dense<0.000000e+00> : vector<8x8xf32>
    %17 = tpu.matmul %16, %7, %cst_7 {dimension_numbers = #tpu.dot_dimension_numbers<[1], [0], [0], [1], [0, 0, 1, 1], [], []>} : vector<8x8xbf16>, vector<8x8xbf16>, vector<8x8xf32> -> vector<8x8xf32>
    %18 = tpu.reciprocal %15 {approx = true} : vector<8x1xf32> -> vector<8x1xf32>
    %19 = vector.broadcast %18 : vector<8x1xf32> to vector<8x8xf32>
    %20 = arith.mulf %17, %19 : vector<8x8xf32>
    %c0_8 = arith.constant 0 : index
    %c0_9 = arith.constant 0 : index
    %21 = vector.load %arg6[%c0_8, %c0_9] : memref<16x32xf32, #tpu.memory_space<vmem>>, vector<8x8xf32>
    tpu.vector_store %arg6[%c0_8, %c0_9], %20 {strides = array<i32>} : memref<16x32xf32, #tpu.memory_space<vmem>>, vector<8x8xf32>,
    %22 = vector.extract_strided_slice %4 {offsets = [0, 8], sizes = [8, 8], strides = [1, 1]} : vector<16x96xbf16> to vector<8x8xbf16>
    %23 = vector.extract_strided_slice %4 {offsets = [0, 40], sizes = [8, 8], strides = [1, 1]} : vector<16x96xbf16> to vector<8x8xbf16>
    %24 = vector.extract_strided_slice %4 {offsets = [0, 72], sizes = [8, 8], strides = [1, 1]} : vector<16x96xbf16> to vector<8x8xbf16>
    %cst_10 = arith.constant dense<0.000000e+00> : vector<8x8xf32>
    %25 = tpu.matmul %22, %23, %cst_10 {dimension_numbers = #tpu.dot_dimension_numbers<[1], [1], [0], [0], [0, 0, 1, 0], [], []>} : vector<8x8xbf16>, vector<8x8xbf16>, vector<8x8xf32> -> vector<8x8xf32>
    %cst_11 = arith.constant dense<0xFF800000> : vector<8xf32>
    %26 = vector.multi_reduction <maximumf>, %25, %cst_11 [1] : vector<8x8xf32> to vector<8xf32>
    %27 = vector.shape_cast %26 : vector<8xf32> to vector<8x1xf32>
    %28 = vector.broadcast %27 : vector<8x1xf32> to vector<8x8xf32>
    %29 = arith.subf %25, %28 : vector<8x8xf32>
    %30 = math.exp %29 : vector<8x8xf32>
    %cst_12 = arith.constant dense<0.000000e+00> : vector<8xf32>
    %31 = vector.multi_reduction <add>, %30, %cst_12 [1] : vector<8x8xf32> to vector<8xf32>
    %32 = vector.shape_cast %31 : vector<8xf32> to vector<8x1xf32>
    %33 = arith.truncf %30 : vector<8x8xf32> to vector<8x8xbf16>
    %cst_13 = arith.constant dense<0.000000e+00> : vector<8x8xf32>
    %34 = tpu.matmul %33, %24, %cst_13 {dimension_numbers = #tpu.dot_dimension_numbers<[1], [0], [0], [1], [0, 0, 1, 1], [], []>} : vector<8x8xbf16>, vector<8x8xbf16>, vector<8x8xf32> -> vector<8x8xf32>
    %35 = tpu.reciprocal %32 {approx = true} : vector<8x1xf32> -> vector<8x1xf32>
    %36 = vector.broadcast %35 : vector<8x1xf32> to vector<8x8xf32>
    %37 = arith.mulf %34, %36 : vector<8x8xf32>
    %c0_14 = arith.constant 0 : index
    %c8 = arith.constant 8 : index
    %38 = vector.load %arg6[%c0_14, %c8] : memref<16x32xf32, #tpu.memory_space<vmem>>, vector<8x8xf32>
    tpu.vector_store %arg6[%c0_14, %c8], %37 {strides = array<i32>} : memref<16x32xf32, #tpu.memory_space<vmem>>, vector<8x8xf32>,
    %39 = vector.extract_strided_slice %4 {offsets = [0, 16], sizes = [8, 8], strides = [1, 1]} : vector<16x96xbf16> to vector<8x8xbf16>
    %40 = vector.extract_strided_slice %4 {offsets = [0, 48], sizes = [8, 8], strides = [1, 1]} : vector<16x96xbf16> to vector<8x8xbf16>
    %41 = vector.extract_strided_slice %4 {offsets = [0, 80], sizes = [8, 8], strides = [1, 1]} : vector<16x96xbf16> to vector<8x8xbf16>
    %cst_15 = arith.constant dense<0.000000e+00> : vector<8x8xf32>
    %42 = tpu.matmul %39, %40, %cst_15 {dimension_numbers = #tpu.dot_dimension_numbers<[1], [1], [0], [0], [0, 0, 1, 0], [], []>} : vector<8x8xbf16>, vector<8x8xbf16>, vector<8x8xf32> -> vector<8x8xf32>
    %cst_16 = arith.constant dense<0xFF800000> : vector<8xf32>
    %43 = vector.multi_reduction <maximumf>, %42, %cst_16 [1] : vector<8x8xf32> to vector<8xf32>
    %44 = vector.shape_cast %43 : vector<8xf32> to vector<8x1xf32>
    %45 = vector.broadcast %44 : vector<8x1xf32> to vector<8x8xf32>
    %46 = arith.subf %42, %45 : vector<8x8xf32>
    %47 = math.exp %46 : vector<8x8xf32>
    %cst_17 = arith.constant dense<0.000000e+00> : vector<8xf32>
    %48 = vector.multi_reduction <add>, %47, %cst_17 [1] : vector<8x8xf32> to vector<8xf32>
    %49 = vector.shape_cast %48 : vector<8xf32> to vector<8x1xf32>
    %50 = arith.truncf %47 : vector<8x8xf32> to vector<8x8xbf16>
    %cst_18 = arith.constant dense<0.000000e+00> : vector<8x8xf32>
    %51 = tpu.matmul %50, %41, %cst_18 {dimension_numbers = #tpu.dot_dimension_numbers<[1], [0], [0], [1], [0, 0, 1, 1], [], []>} : vector<8x8xbf16>, vector<8x8xbf16>, vector<8x8xf32> -> vector<8x8xf32>
    %52 = tpu.reciprocal %49 {approx = true} : vector<8x1xf32> -> vector<8x1xf32>
    %53 = vector.broadcast %52 : vector<8x1xf32> to vector<8x8xf32>
    %54 = arith.mulf %51, %53 : vector<8x8xf32>
    %c0_19 = arith.constant 0 : index
    %c16 = arith.constant 16 : index
    %55 = vector.load %arg6[%c0_19, %c16] : memref<16x32xf32, #tpu.memory_space<vmem>>, vector<8x8xf32>
    tpu.vector_store %arg6[%c0_19, %c16], %54 {strides = array<i32>} : memref<16x32xf32, #tpu.memory_space<vmem>>, vector<8x8xf32>,
    %56 = vector.extract_strided_slice %4 {offsets = [0, 24], sizes = [8, 8], strides = [1, 1]} : vector<16x96xbf16> to vector<8x8xbf16>
    %57 = vector.extract_strided_slice %4 {offsets = [0, 56], sizes = [8, 8], strides = [1, 1]} : vector<16x96xbf16> to vector<8x8xbf16>
    %58 = vector.extract_strided_slice %4 {offsets = [0, 88], sizes = [8, 8], strides = [1, 1]} : vector<16x96xbf16> to vector<8x8xbf16>
    %cst_20 = arith.constant dense<0.000000e+00> : vector<8x8xf32>
    %59 = tpu.matmul %56, %57, %cst_20 {dimension_numbers = #tpu.dot_dimension_numbers<[1], [1], [0], [0], [0, 0, 1, 0], [], []>} : vector<8x8xbf16>, vector<8x8xbf16>, vector<8x8xf32> -> vector<8x8xf32>
    %cst_21 = arith.constant dense<0xFF800000> : vector<8xf32>
    %60 = vector.multi_reduction <maximumf>, %59, %cst_21 [1] : vector<8x8xf32> to vector<8xf32>
    %61 = vector.shape_cast %60 : vector<8xf32> to vector<8x1xf32>
    %62 = vector.broadcast %61 : vector<8x1xf32> to vector<8x8xf32>
    %63 = arith.subf %59, %62 : vector<8x8xf32>
    %64 = math.exp %63 : vector<8x8xf32>
    %cst_22 = arith.constant dense<0.000000e+00> : vector<8xf32>
    %65 = vector.multi_reduction <add>, %64, %cst_22 [1] : vector<8x8xf32> to vector<8xf32>
    %66 = vector.shape_cast %65 : vector<8xf32> to vector<8x1xf32>
    %67 = arith.truncf %64 : vector<8x8xf32> to vector<8x8xbf16>
    %cst_23 = arith.constant dense<0.000000e+00> : vector<8x8xf32>
    %68 = tpu.matmul %67, %58, %cst_23 {dimension_numbers = #tpu.dot_dimension_numbers<[1], [0], [0], [1], [0, 0, 1, 1], [], []>} : vector<8x8xbf16>, vector<8x8xbf16>, vector<8x8xf32> -> vector<8x8xf32>
    %69 = tpu.reciprocal %66 {approx = true} : vector<8x1xf32> -> vector<8x1xf32>
    %70 = vector.broadcast %69 : vector<8x1xf32> to vector<8x8xf32>
    %71 = arith.mulf %68, %70 : vector<8x8xf32>
    %c0_24 = arith.constant 0 : index
    %c24 = arith.constant 24 : index
    %72 = vector.load %arg6[%c0_24, %c24] : memref<16x32xf32, #tpu.memory_space<vmem>>, vector<8x8xf32>
    tpu.vector_store %arg6[%c0_24, %c24], %71 {strides = array<i32>} : memref<16x32xf32, #tpu.memory_space<vmem>>, vector<8x8xf32>,
    %73 = vector.extract_strided_slice %4 {offsets = [8, 0], sizes = [8, 8], strides = [1, 1]} : vector<16x96xbf16> to vector<8x8xbf16>
    %74 = vector.extract_strided_slice %4 {offsets = [8, 32], sizes = [8, 8], strides = [1, 1]} : vector<16x96xbf16> to vector<8x8xbf16>
    %75 = vector.extract_strided_slice %4 {offsets = [8, 64], sizes = [8, 8], strides = [1, 1]} : vector<16x96xbf16> to vector<8x8xbf16>
    %cst_25 = arith.constant dense<0.000000e+00> : vector<8x8xf32>
    %76 = tpu.matmul %73, %74, %cst_25 {dimension_numbers = #tpu.dot_dimension_numbers<[1], [1], [0], [0], [0, 0, 1, 0], [], []>} : vector<8x8xbf16>, vector<8x8xbf16>, vector<8x8xf32> -> vector<8x8xf32>
    %cst_26 = arith.constant dense<0xFF800000> : vector<8xf32>
    %77 = vector.multi_reduction <maximumf>, %76, %cst_26 [1] : vector<8x8xf32> to vector<8xf32>
    %78 = vector.shape_cast %77 : vector<8xf32> to vector<8x1xf32>
    %79 = vector.broadcast %78 : vector<8x1xf32> to vector<8x8xf32>
    %80 = arith.subf %76, %79 : vector<8x8xf32>
    %81 = math.exp %80 : vector<8x8xf32>
    %cst_27 = arith.constant dense<0.000000e+00> : vector<8xf32>
    %82 = vector.multi_reduction <add>, %81, %cst_27 [1] : vector<8x8xf32> to vector<8xf32>
    %83 = vector.shape_cast %82 : vector<8xf32> to vector<8x1xf32>
    %84 = arith.truncf %81 : vector<8x8xf32> to vector<8x8xbf16>
    %cst_28 = arith.constant dense<0.000000e+00> : vector<8x8xf32>
    %85 = tpu.matmul %84, %75, %cst_28 {dimension_numbers = #tpu.dot_dimension_numbers<[1], [0], [0], [1], [0, 0, 1, 1], [], []>} : vector<8x8xbf16>, vector<8x8xbf16>, vector<8x8xf32> -> vector<8x8xf32>
    %86 = tpu.reciprocal %83 {approx = true} : vector<8x1xf32> -> vector<8x1xf32>
    %87 = vector.broadcast %86 : vector<8x1xf32> to vector<8x8xf32>
    %88 = arith.mulf %85, %87 : vector<8x8xf32>
    %c8_29 = arith.constant 8 : index
    %c0_30 = arith.constant 0 : index
    %89 = vector.load %arg6[%c8_29, %c0_30] : memref<16x32xf32, #tpu.memory_space<vmem>>, vector<8x8xf32>
    tpu.vector_store %arg6[%c8_29, %c0_30], %88 {strides = array<i32>} : memref<16x32xf32, #tpu.memory_space<vmem>>, vector<8x8xf32>,
    %90 = vector.extract_strided_slice %4 {offsets = [8, 8], sizes = [8, 8], strides = [1, 1]} : vector<16x96xbf16> to vector<8x8xbf16>
    %91 = vector.extract_strided_slice %4 {offsets = [8, 40], sizes = [8, 8], strides = [1, 1]} : vector<16x96xbf16> to vector<8x8xbf16>
    %92 = vector.extract_strided_slice %4 {offsets = [8, 72], sizes = [8, 8], strides = [1, 1]} : vector<16x96xbf16> to vector<8x8xbf16>
    %cst_31 = arith.constant dense<0.000000e+00> : vector<8x8xf32>
    %93 = tpu.matmul %90, %91, %cst_31 {dimension_numbers = #tpu.dot_dimension_numbers<[1], [1], [0], [0], [0, 0, 1, 0], [], []>} : vector<8x8xbf16>, vector<8x8xbf16>, vector<8x8xf32> -> vector<8x8xf32>
    %cst_32 = arith.constant dense<0xFF800000> : vector<8xf32>
    %94 = vector.multi_reduction <maximumf>, %93, %cst_32 [1] : vector<8x8xf32> to vector<8xf32>
    %95 = vector.shape_cast %94 : vector<8xf32> to vector<8x1xf32>
    %96 = vector.broadcast %95 : vector<8x1xf32> to vector<8x8xf32>
    %97 = arith.subf %93, %96 : vector<8x8xf32>
    %98 = math.exp %97 : vector<8x8xf32>
    %cst_33 = arith.constant dense<0.000000e+00> : vector<8xf32>
    %99 = vector.multi_reduction <add>, %98, %cst_33 [1] : vector<8x8xf32> to vector<8xf32>
    %100 = vector.shape_cast %99 : vector<8xf32> to vector<8x1xf32>
    %101 = arith.truncf %98 : vector<8x8xf32> to vector<8x8xbf16>
    %cst_34 = arith.constant dense<0.000000e+00> : vector<8x8xf32>
    %102 = tpu.matmul %101, %92, %cst_34 {dimension_numbers = #tpu.dot_dimension_numbers<[1], [0], [0], [1], [0, 0, 1, 1], [], []>} : vector<8x8xbf16>, vector<8x8xbf16>, vector<8x8xf32> -> vector<8x8xf32>
    %103 = tpu.reciprocal %100 {approx = true} : vector<8x1xf32> -> vector<8x1xf32>
    %104 = vector.broadcast %103 : vector<8x1xf32> to vector<8x8xf32>
    %105 = arith.mulf %102, %104 : vector<8x8xf32>
    %c8_35 = arith.constant 8 : index
    %c8_36 = arith.constant 8 : index
    %106 = vector.load %arg6[%c8_35, %c8_36] : memref<16x32xf32, #tpu.memory_space<vmem>>, vector<8x8xf32>
    tpu.vector_store %arg6[%c8_35, %c8_36], %105 {strides = array<i32>} : memref<16x32xf32, #tpu.memory_space<vmem>>, vector<8x8xf32>,
    %107 = vector.extract_strided_slice %4 {offsets = [8, 16], sizes = [8, 8], strides = [1, 1]} : vector<16x96xbf16> to vector<8x8xbf16>
    %108 = vector.extract_strided_slice %4 {offsets = [8, 48], sizes = [8, 8], strides = [1, 1]} : vector<16x96xbf16> to vector<8x8xbf16>
    %109 = vector.extract_strided_slice %4 {offsets = [8, 80], sizes = [8, 8], strides = [1, 1]} : vector<16x96xbf16> to vector<8x8xbf16>
    %cst_37 = arith.constant dense<0.000000e+00> : vector<8x8xf32>
    %110 = tpu.matmul %107, %108, %cst_37 {dimension_numbers = #tpu.dot_dimension_numbers<[1], [1], [0], [0], [0, 0, 1, 0], [], []>} : vector<8x8xbf16>, vector<8x8xbf16>, vector<8x8xf32> -> vector<8x8xf32>
    %cst_38 = arith.constant dense<0xFF800000> : vector<8xf32>
    %111 = vector.multi_reduction <maximumf>, %110, %cst_38 [1] : vector<8x8xf32> to vector<8xf32>
    %112 = vector.shape_cast %111 : vector<8xf32> to vector<8x1xf32>
    %113 = vector.broadcast %112 : vector<8x1xf32> to vector<8x8xf32>
    %114 = arith.subf %110, %113 : vector<8x8xf32>
    %115 = math.exp %114 : vector<8x8xf32>
    %cst_39 = arith.constant dense<0.000000e+00> : vector<8xf32>
    %116 = vector.multi_reduction <add>, %115, %cst_39 [1] : vector<8x8xf32> to vector<8xf32>
    %117 = vector.shape_cast %116 : vector<8xf32> to vector<8x1xf32>
    %118 = arith.truncf %115 : vector<8x8xf32> to vector<8x8xbf16>
    %cst_40 = arith.constant dense<0.000000e+00> : vector<8x8xf32>
    %119 = tpu.matmul %118, %109, %cst_40 {dimension_numbers = #tpu.dot_dimension_numbers<[1], [0], [0], [1], [0, 0, 1, 1], [], []>} : vector<8x8xbf16>, vector<8x8xbf16>, vector<8x8xf32> -> vector<8x8xf32>
    %120 = tpu.reciprocal %117 {approx = true} : vector<8x1xf32> -> vector<8x1xf32>
    %121 = vector.broadcast %120 : vector<8x1xf32> to vector<8x8xf32>
    %122 = arith.mulf %119, %121 : vector<8x8xf32>
    %c8_41 = arith.constant 8 : index
    %c16_42 = arith.constant 16 : index
    %123 = vector.load %arg6[%c8_41, %c16_42] : memref<16x32xf32, #tpu.memory_space<vmem>>, vector<8x8xf32>
    tpu.vector_store %arg6[%c8_41, %c16_42], %122 {strides = array<i32>} : memref<16x32xf32, #tpu.memory_space<vmem>>, vector<8x8xf32>,
    %124 = vector.extract_strided_slice %4 {offsets = [8, 24], sizes = [8, 8], strides = [1, 1]} : vector<16x96xbf16> to vector<8x8xbf16>
    %125 = vector.extract_strided_slice %4 {offsets = [8, 56], sizes = [8, 8], strides = [1, 1]} : vector<16x96xbf16> to vector<8x8xbf16>
    %126 = vector.extract_strided_slice %4 {offsets = [8, 88], sizes = [8, 8], strides = [1, 1]} : vector<16x96xbf16> to vector<8x8xbf16>
    %cst_43 = arith.constant dense<0.000000e+00> : vector<8x8xf32>
    %127 = tpu.matmul %124, %125, %cst_43 {dimension_numbers = #tpu.dot_dimension_numbers<[1], [1], [0], [0], [0, 0, 1, 0], [], []>} : vector<8x8xbf16>, vector<8x8xbf16>, vector<8x8xf32> -> vector<8x8xf32>
    %cst_44 = arith.constant dense<0xFF800000> : vector<8xf32>
    %128 = vector.multi_reduction <maximumf>, %127, %cst_44 [1] : vector<8x8xf32> to vector<8xf32>
    %129 = vector.shape_cast %128 : vector<8xf32> to vector<8x1xf32>
    %130 = vector.broadcast %129 : vector<8x1xf32> to vector<8x8xf32>
    %131 = arith.subf %127, %130 : vector<8x8xf32>
    %132 = math.exp %131 : vector<8x8xf32>
    %cst_45 = arith.constant dense<0.000000e+00> : vector<8xf32>
    %133 = vector.multi_reduction <add>, %132, %cst_45 [1] : vector<8x8xf32> to vector<8xf32>
    %134 = vector.shape_cast %133 : vector<8xf32> to vector<8x1xf32>
    %135 = arith.truncf %132 : vector<8x8xf32> to vector<8x8xbf16>
    %cst_46 = arith.constant dense<0.000000e+00> : vector<8x8xf32>
    %136 = tpu.matmul %135, %126, %cst_46 {dimension_numbers = #tpu.dot_dimension_numbers<[1], [0], [0], [1], [0, 0, 1, 1], [], []>} : vector<8x8xbf16>, vector<8x8xbf16>, vector<8x8xf32> -> vector<8x8xf32>
    %137 = tpu.reciprocal %134 {approx = true} : vector<8x1xf32> -> vector<8x1xf32>
    %138 = vector.broadcast %137 : vector<8x1xf32> to vector<8x8xf32>
    %139 = arith.mulf %136, %138 : vector<8x8xf32>
    %c8_47 = arith.constant 8 : index
    %c24_48 = arith.constant 24 : index
    %140 = vector.load %arg6[%c8_47, %c24_48] : memref<16x32xf32, #tpu.memory_space<vmem>>, vector<8x8xf32>
    tpu.vector_store %arg6[%c8_47, %c24_48], %139 {strides = array<i32>} : memref<16x32xf32, #tpu.memory_space<vmem>>, vector<8x8xf32>,
    %c0_49 = arith.constant 0 : index
    %c0_50 = arith.constant 0 : index
    %141 = vector.load %arg6[%c0_49, %c0_50] : memref<16x32xf32, #tpu.memory_space<vmem>>, vector<16x32xf32>
    %142 = arith.truncf %141 : vector<16x32xf32> to vector<16x32xbf16>
    %c0_51 = arith.constant 0 : index
    %c0_52 = arith.constant 0 : index
    %143 = vector.load %arg3[%c0_51, %c0_52] : memref<32x32xbf16, #tpu.memory_space<vmem>>, vector<32x32xbf16>
    %cst_53 = arith.constant dense<0.000000e+00> : vector<16x32xf32>
    %144 = tpu.matmul %142, %143, %cst_53 {dimension_numbers = #tpu.dot_dimension_numbers<[1], [0], [0], [1], [0, 0, 1, 1], [], []>} : vector<16x32xbf16>, vector<32x32xbf16>, vector<16x32xf32> -> vector<16x32xf32>
    %c0_54 = arith.constant 0 : index
    %c0_55 = arith.constant 0 : index
    %145 = vector.load %arg4[%c0_54, %c0_55] : memref<1x32xf32, #tpu.memory_space<vmem>>, vector<1x32xf32>
    %146 = vector.broadcast %145 : vector<1x32xf32> to vector<16x32xf32>
    %147 = arith.addf %144, %146 : vector<16x32xf32>
    %148 = vector.shape_cast %147 : vector<16x32xf32> to vector<2x8x32xf32>
    %c0_56 = arith.constant 0 : index
    %c0_57 = arith.constant 0 : index
    %c0_58 = arith.constant 0 : index
    %149 = vector.load %arg5[%c0_56, %c0_57, %c0_58] : memref<2x8x32xf32, #tpu.memory_space<vmem>>, vector<2x8x32xf32>
    tpu.vector_store %arg5[%c0_56, %c0_57, %c0_58], %148 {strides = array<i32>} : memref<2x8x32xf32, #tpu.memory_space<vmem>>, vector<2x8x32xf32>,
    return
  }
  func.func @transform_0(%arg0: i32) -> (i32, i32, i32) {
    %c0_i32 = arith.constant 0 : i32
    %c0_i32_0 = arith.constant 0 : i32
    %c0_i32_1 = arith.constant 0 : i32
    return %arg0, %c0_i32, %c0_i32_0 : i32, i32, i32
  }
  func.func @transform_1(%arg0: i32) -> (i32, i32) {
    %c0_i32 = arith.constant 0 : i32
    %c0_i32_0 = arith.constant 0 : i32
    %c0_i32_1 = arith.constant 0 : i32
    return %c0_i32, %c0_i32_0 : i32, i32
  }
  func.func @transform_2(%arg0: i32) -> (i32, i32) {
    %c0_i32 = arith.constant 0 : i32
    %c0_i32_0 = arith.constant 0 : i32
    %c0_i32_1 = arith.constant 0 : i32
    return %c0_i32, %c0_i32_0 : i32, i32
  }
  func.func @transform_3(%arg0: i32) -> (i32, i32) {
    %c0_i32 = arith.constant 0 : i32
    %c0_i32_0 = arith.constant 0 : i32
    %c0_i32_1 = arith.constant 0 : i32
    return %c0_i32, %c0_i32_0 : i32, i32
  }
  func.func @transform_4(%arg0: i32) -> (i32, i32, i32) {
    %c0_i32 = arith.constant 0 : i32
    %c0_i32_0 = arith.constant 0 : i32
    %c0_i32_1 = arith.constant 0 : i32
    return %arg0, %c0_i32, %c0_i32_0 : i32, i32, i32
  }
}

</mosaic_0001>

<llo_original>
// kernel: tpu_custom_call.1
$region0: #{tpu_custom_call.1}
  #allocation0 [shape = 'u32[]', space=smem, size = 0x4, offset = 0x4, fixed_abs, tag = 'smem constant byte address 0x4 - core index']
  #allocation1 [shape = 'u32[144,128]{1,0:T(1,128)}', space=vmem, size = 0x12000, scoped, tag = 'internal scratch']
  #allocation2 [shape = 'f32[16,32]{1,0:T(8,128)}', space=vmem, size = 0x2000, scoped, tag = 'scratch operand']
  %s0 = inlined_call_operand.hbm [shape: bf16[2,8,32], index: 0, kind: input, shape index: {}]
  %s1 = inlined_call_operand.hbm [shape: bf16[32,96], index: 1, kind: input, shape index: {}]
  %s2 = inlined_call_operand.hbm [shape: bf16[32,32], index: 2, kind: input, shape index: {}]
  %s3 = inlined_call_operand.vmem [shape: f32[1,32], index: 3, kind: input, shape index: {}]
  %s4 = inlined_call_operand.hbm [shape: f32[2,8,32], index: 4, kind: output, shape index: {}]
  %s5 = sld [smem:[#allocation0]]
  $region38: #{tpu_custom_call.1} parent=0
    _
  %s7 = ssub.s32 1, %s5
  %s8 = scalar_select 0, %s7, %s5
  $region1: #{tpu_custom_call.1} parent=0
    #allocation3 [shape = 'u8[4096]{0}', space=vmem, size = 0x1000, scoped, tag = 'input window, operand 0, single buffered']
    #allocation4 [shape = 's32[1]{0}', space=sflag, size = 0x4, scoped, tag = 'scoped memory for tpu_custom_call.1']
    #allocation5 [shape = 's32[1]{0}', space=sflag, size = 0x4, scoped, tag = 'scoped memory for tpu_custom_call.1']
    #allocation6 [shape = 'u8[8192]{0}', space=vmem, size = 0x2000, scoped, tag = 'input window, operand 1, single buffered']
    #allocation7 [shape = 's32[1]{0}', space=sflag, size = 0x4, scoped, tag = 'scoped memory for tpu_custom_call.1']
    #allocation8 [shape = 'u8[8192]{0}', space=vmem, size = 0x2000, scoped, tag = 'input window, operand 2, single buffered']
    #allocation9 [shape = 'u8[8192]{0}', space=vmem, size = 0x2000, scoped, tag = 'output window, operand 0, single buffered']
    %9 = vsyncpa [#allocation4], 0
    %10 = vsyncpa [#allocation7], 0
    %11 = vsyncpa [#allocation5], 0
    // Predicated region
    $region2: #{tpu_custom_call.1} parent=1 // pred_check
      _
    $region3: #{tpu_custom_call.1} parent=1 // pred_check_branch
      %13 = sbr.rel (0) target = $region5
    $region4: #{tpu_custom_call.1} parent=1 // pred_region
      %s15 = ssub.s32 128, 128
      %16 = vsyncadd [#allocation4], %s15
      %s17 = sshll.u32 [#allocation3], 4
      %s18 = int_to_ptr.vmem [resolvable:$true] %s17
      %23 = dma.hbm_to_vmem [thread:$0]  %s0, 128, %s18, [#allocation4], 64, 64, 4
    $region5: #{tpu_custom_call.1} parent=1 // pred_fallthru
      _
    // Predicated region
    $region6: #{tpu_custom_call.1} parent=1 // pred_check
      _
    $region7: #{tpu_custom_call.1} parent=1 // pred_check_branch
      %25 = sbr.rel (0) target = $region9
    $region8: #{tpu_custom_call.1} parent=1 // pred_region
      %s27 = ssub.s32 256, 256
      %28 = vsyncadd [#allocation7], %s27
      %s29 = sshll.u32 [#allocation6], 4
      %s30 = int_to_ptr.vmem [resolvable:$true] %s29
      %35 = dma.hbm_to_vmem [thread:$0]  %s1, 256, %s30, [#allocation7], 64, 64, 4
    $region9: #{tpu_custom_call.1} parent=1 // pred_fallthru
      _
    // Predicated region
    $region10: #{tpu_custom_call.1} parent=1 // pred_check
      _
    $region11: #{tpu_custom_call.1} parent=1 // pred_check_branch
      %37 = sbr.rel (0) target = $region13
    $region12: #{tpu_custom_call.1} parent=1 // pred_region
      %s39 = ssub.s32 256, 256
      %40 = vsyncadd [#allocation7], %s39
      %s41 = sshll.u32 [#allocation8], 4
      %s42 = int_to_ptr.vmem [resolvable:$true] %s41
      %47 = dma.hbm_to_vmem [thread:$0]  %s2, 256, %s42, [#allocation7], 64, 64, 4
    $region13: #{tpu_custom_call.1} parent=1 // pred_fallthru
      _
    // Predicated region
    $region14: #{tpu_custom_call.1} parent=1 // pred_check
      _
    $region15: #{tpu_custom_call.1} parent=1 // pred_check_branch
      %49 = sbr.rel (0) target = $region17
    $region16: #{tpu_custom_call.1} parent=1 // pred_region
      _
    $region17: #{tpu_custom_call.1} parent=1 // pred_fallthru
      _
    // Predicated region
    $region18: #{tpu_custom_call.1} parent=1 // pred_check
      _
    $region19: #{tpu_custom_call.1} parent=1 // pred_check_branch
      %51 = sbr.rel (0) target = $region21
    $region20: #{tpu_custom_call.1} parent=1 // pred_region
      %52 = dma.done [#allocation4], 128
    $region21: #{tpu_custom_call.1} parent=1 // pred_fallthru
      _
    // Predicated region
    $region22: #{tpu_custom_call.1} parent=1 // pred_check
      _
    $region23: #{tpu_custom_call.1} parent=1 // pred_check_branch
      %54 = sbr.rel (0) target = $region25
    $region24: #{tpu_custom_call.1} parent=1 // pred_region
      %55 = dma.done [#allocation7], 256
    $region25: #{tpu_custom_call.1} parent=1 // pred_fallthru
      _
    // Predicated region
    $region26: #{tpu_custom_call.1} parent=1 // pred_check
      _
    $region27: #{tpu_custom_call.1} parent=1 // pred_check_branch
      %57 = sbr.rel (0) target = $region29
    $region28: #{tpu_custom_call.1} parent=1 // pred_region
      %58 = dma.done [#allocation7], 256
    $region29: #{tpu_custom_call.1} parent=1 // pred_fallthru
      _
    %v60 = vld [vmem:[#allocation3] sm:$0xf]
    %v61 = vld [vmem:[#allocation3 + $0x4] sm:$0xf]
    %v62 = vld [vmem:[#allocation6] sm:$0xf]
    %v63 = vld [vmem:[#allocation6 + $0x4] sm:$0xf]
    %v64 = vld [vmem:[#allocation6 + $0x8] sm:$0xf]
    %v65 = vld [vmem:[#allocation6 + $0xc] sm:$0xf]
    %v68 = vunpack.c.l.b16 %v60
    %v69 = vunpack.c.l.b16 %v61
    %v70 = vpack.c.b16 %v69, %v68
    %v75 = vunpack.c.l.b16 %v62
    %v76 = vunpack.c.l.b16 %v63
    %v77 = vunpack.c.l.b16 %v64
    %v78 = vunpack.c.l.b16 %v65
    %v79 = vpack.c.b16 %v76, %v75
    %v80 = vpack.c.b16 %v78, %v77
    %vm83 = vcmask 261120
    %v85 = vsel %vm83, %v70, 0
    %87 = vmatprep.subr.bf16.mxu0 0
    %88 = vmatpush1.bf16.msra.mxu0 %v79
    %89 = vmatprep.subr.bf16.mxu0 0
    %90 = vmatpush1.bf16.msra.mxu0 %v80
    %91 = vmatprep.subr.bf16.mxu0 0
    %92 = vmatpush1.bf16.msra.mxu0 0
    %93 = vmatprep.subr.bf16.mxu0 0
    %94 = vmatpush1.bf16.msra.mxu0 0
    %95 = vmatprep.subr.bf16.mxu0 0
    %96 = vmatpush1.bf16.msra.mxu0 0
    %97 = vmatprep.subr.bf16.mxu0 0
    %98 = vmatpush1.bf16.msra.mxu0 0
    %99 = vmatprep.subr.bf16.mxu0 0
    %100 = vmatpush1.bf16.msra.mxu0 0
    %101 = vmatprep.subr.bf16.mxu0 0
    %102 = vmatpush1.bf16.msra.mxu0 0
    %103 = vmatprep.subr.bf16.mxu0 0
    %104 = vmatpush1.bf16.msra.mxu0 0
    %105 = vmatprep.subr.bf16.mxu0 0
    %106 = vmatpush1.bf16.msra.mxu0 0
    %107 = vmatprep.subr.bf16.mxu0 0
    %108 = vmatpush1.bf16.msra.mxu0 0
    %109 = vmatprep.subr.bf16.mxu0 0
    %110 = vmatpush1.bf16.msra.mxu0 0
    %111 = vmatprep.subr.bf16.mxu0 0
    %112 = vmatpush1.bf16.msra.mxu0 0
    %113 = vmatprep.subr.bf16.mxu0 0
    %114 = vmatpush1.bf16.msra.mxu0 0
    %115 = vmatprep.subr.bf16.mxu0 0
    %116 = vmatpush1.bf16.msra.mxu0 0
    %117 = vmatprep.subr.bf16.mxu0 0
    %118 = vmatpush1.bf16.msra.mxu0 0
    %119 = vmatprep.mubr.bf16.mxu0 0
    %120 = vmatmul.mubr.bf16.gmra.mrb[0].mxu0 %v85
    %v121 = vpop.f32.mrb[0].mxu0
    %v122 = vadd.f32 0.0, %v121
    %v123 = vpop.f32.mrb[0].mxu0
    %v124 = vpop.f32.mrb[0].mxu0
    %v125 = vadd.f32 0.0, %v124
    %v126 = vpop.f32.mrb[0].mxu0
    %127 = vdwg.mxu0
    %v128 = vpack.c.bf16 %v125, %v122
    %130 = vrot.lane.b32.xlu0 %v128, 96
    %v131 = vpop.permute.xlu0 %130
    %vm132 = vcmask 64512
    %v134 = vsel %vm132, %v128, 0
    %v137 = vsel %vm132, %v131, 0
    %139 = vmatprep.subr.bf16.mxu0 0
    %140 = vmatpush1.bf16.xpose.msra.mxu0 %v137
    %141 = vmatprep.subr.bf16.mxu0 0
    %142 = vmatpush1.bf16.xpose.msra.mxu0 0
    %143 = vmatprep.subr.bf16.mxu0 0
    %144 = vmatpush1.bf16.xpose.msra.mxu0 0
    %145 = vmatprep.subr.bf16.mxu0 0
    %146 = vmatpush1.bf16.xpose.msra.mxu0 0
    %147 = vmatprep.subr.bf16.mxu0 0
    %148 = vmatpush1.bf16.xpose.msra.mxu0 0
    %149 = vmatprep.subr.bf16.mxu0 0
    %150 = vmatpush1.bf16.xpose.msra.mxu0 0
    %151 = vmatprep.subr.bf16.mxu0 0
    %152 = vmatpush1.bf16.xpose.msra.mxu0 0
    %153 = vmatprep.subr.bf16.mxu0 0
    %154 = vmatpush1.bf16.xpose.msra.mxu0 0
    %155 = vmatprep.subr.bf16.mxu0 0
    %156 = vmatpush1.bf16.xpose.msra.mxu0 0
    %157 = vmatprep.subr.bf16.mxu0 0
    %158 = vmatpush1.bf16.xpose.msra.mxu0 0
    %159 = vmatprep.subr.bf16.mxu0 0
    %160 = vmatpush1.bf16.xpose.msra.mxu0 0
    %161 = vmatprep.subr.bf16.mxu0 0
    %162 = vmatpush1.bf16.xpose.msra.mxu0 0
    %163 = vmatprep.subr.bf16.mxu0 0
    %164 = vmatpush1.bf16.xpose.msra.mxu0 0
    %165 = vmatprep.subr.bf16.mxu0 0
    %166 = vmatpush1.bf16.xpose.msra.mxu0 0
    %167 = vmatprep.subr.bf16.mxu0 0
    %168 = vmatpush1.bf16.xpose.msra.mxu0 0
    %169 = vmatprep.subr.bf16.mxu0 0
    %170 = vmatpush1.bf16.xpose.msra.mxu0 0
    %171 = vmatprep.mubr.bf16.mxu0 0
    %172 = vmatmul.mubr.bf16.gmra.mrb[0].mxu0 %v134
    %v173 = vpop.f32.mrb[0].mxu0
    %v174 = vadd.f32 0.0, %v173
    %v175 = vpop.f32.mrb[0].mxu0
    %v176 = vpop.f32.mrb[0].mxu0
    %v177 = vpop.f32.mrb[0].mxu0
    %178 = vdwg.mxu0
    %v179 = vsel %vm132, %v174, -inf
    %180 = vmax.xlane.f32.xlu0 %v179
    %v181 = vpop.xlane.xlu0 %180
    %v182 = vsub.f32 %v174, %v181
    %v183 = vmul.f32 %v182, 1.442695
    %v184 = vpow.pop %v183
    %v185 = vsel %vm132, %v184, 0.0
    %186 = vadd.xlane.f32.xlu0 %v185
    %v187 = vpop.xlane.xlu0 %186
    %v188 = vpack.c.bf16 %v184, %v184
    %189 = vrot.lane.b32.xlu0 %v128, 64
    %v190 = vpop.permute.xlu0 %189
    %v192 = vsel %vm132, %v188, 0
    %vm194 = vcmask 1043456
    %v196 = vsel %vm194, %v190, 0
    %198 = vmatprep.subr.bf16.mxu0 0
    %199 = vmatpush1.bf16.msra.mxu0 %v196
    %200 = vmatprep.subr.bf16.mxu0 0
    %201 = vmatpush1.bf16.msra.mxu0 0
    %202 = vmatprep.subr.bf16.mxu0 0
    %203 = vmatpush1.bf16.msra.mxu0 0
    %204 = vmatprep.subr.bf16.mxu0 0
    %205 = vmatpush1.bf16.msra.mxu0 0
    %206 = vmatprep.subr.bf16.mxu0 0
    %207 = vmatpush1.bf16.msra.mxu0 0
    %208 = vmatprep.subr.bf16.mxu0 0
    %209 = vmatpush1.bf16.msra.mxu0 0
    %210 = vmatprep.subr.bf16.mxu0 0
    %211 = vmatpush1.bf16.msra.mxu0 0
    %212 = vmatprep.subr.bf16.mxu0 0
    %213 = vmatpush1.bf16.msra.mxu0 0
    %214 = vmatprep.subr.bf16.mxu0 0
    %215 = vmatpush1.bf16.msra.mxu0 0
    %216 = vmatprep.subr.bf16.mxu0 0
    %217 = vmatpush1.bf16.msra.mxu0 0
    %218 = vmatprep.subr.bf16.mxu0 0
    %219 = vmatpush1.bf16.msra.mxu0 0
    %220 = vmatprep.subr.bf16.mxu0 0
    %221 = vmatpush1.bf16.msra.mxu0 0
    %222 = vmatprep.subr.bf16.mxu0 0
    %223 = vmatpush1.bf16.msra.mxu0 0
    %224 = vmatprep.subr.bf16.mxu0 0
    %225 = vmatpush1.bf16.msra.mxu0 0
    %226 = vmatprep.subr.bf16.mxu0 0
    %227 = vmatpush1.bf16.msra.mxu0 0
    %228 = vmatprep.subr.bf16.mxu0 0
    %229 = vmatpush1.bf16.msra.mxu0 0
    %230 = vmatprep.mubr.bf16.mxu0 0
    %231 = vmatmul.mubr.bf16.gmra.mrb[0].mxu0 %v192
    %v232 = vpop.f32.mrb[0].mxu0
    %v233 = vadd.f32 0.0, %v232
    %v234 = vpop.f32.mrb[0].mxu0
    %v235 = vpop.f32.mrb[0].mxu0
    %v236 = vpop.f32.mrb[0].mxu0
    %237 = vdwg.mxu0
    %v238 = vrcp.pop %v187
    %v239 = vmul.f32 %v233, %v238
    %240 = vst.msk [vmem:[#allocation2] sm:$0xff] %vm132, %v239
    %241 = vrot.lane.b32.xlu0 %v128, 120
    %v242 = vpop.permute.xlu0 %241
    %243 = vrot.lane.b32.xlu0 %v128, 88
    %v244 = vpop.permute.xlu0 %243
    %v246 = vsel %vm132, %v242, 0
    %v249 = vsel %vm132, %v244, 0
    %251 = vmatprep.subr.bf16.mxu0 0
    %252 = vmatpush1.bf16.xpose.msra.mxu0 %v249
    %253 = vmatprep.subr.bf16.mxu0 0
    %254 = vmatpush1.bf16.xpose.msra.mxu0 0
    %255 = vmatprep.subr.bf16.mxu0 0
    %256 = vmatpush1.bf16.xpose.msra.mxu0 0
    %257 = vmatprep.subr.bf16.mxu0 0
    %258 = vmatpush1.bf16.xpose.msra.mxu0 0
    %259 = vmatprep.subr.bf16.mxu0 0
    %260 = vmatpush1.bf16.xpose.msra.mxu0 0
    %261 = vmatprep.subr.bf16.mxu0 0
    %262 = vmatpush1.bf16.xpose.msra.mxu0 0
    %263 = vmatprep.subr.bf16.mxu0 0
    %264 = vmatpush1.bf16.xpose.msra.mxu0 0
    %265 = vmatprep.subr.bf16.mxu0 0
    %266 = vmatpush1.bf16.xpose.msra.mxu0 0
    %267 = vmatprep.subr.bf16.mxu0 0
    %268 = vmatpush1.bf16.xpose.msra.mxu0 0
    %269 = vmatprep.subr.bf16.mxu0 0
    %270 = vmatpush1.bf16.xpose.msra.mxu0 0
    %271 = vmatprep.subr.bf16.mxu0 0
    %272 = vmatpush1.bf16.xpose.msra.mxu0 0
    %273 = vmatprep.subr.bf16.mxu0 0
    %274 = vmatpush1.bf16.xpose.msra.mxu0 0
    %275 = vmatprep.subr.bf16.mxu0 0
    %276 = vmatpush1.bf16.xpose.msra.mxu0 0
    %277 = vmatprep.subr.bf16.mxu0 0
    %278 = vmatpush1.bf16.xpose.msra.mxu0 0
    %279 = vmatprep.subr.bf16.mxu0 0
    %280 = vmatpush1.bf16.xpose.msra.mxu0 0
    %281 = vmatprep.subr.bf16.mxu0 0
    %282 = vmatpush1.bf16.xpose.msra.mxu0 0
    %283 = vmatprep.mubr.bf16.mxu0 0
    %284 = vmatmul.mubr.bf16.gmra.mrb[0].mxu0 %v246
    %v285 = vpop.f32.mrb[0].mxu0
    %v286 = vadd.f32 0.0, %v285
    %v287 = vpop.f32.mrb[0].mxu0
    %v288 = vpop.f32.mrb[0].mxu0
    %v289 = vpop.f32.mrb[0].mxu0
    %290 = vdwg.mxu0
    %v291 = vsel %vm132, %v286, -inf
    %292 = vmax.xlane.f32.xlu0 %v291
    %v293 = vpop.xlane.xlu0 %292
    %v294 = vsub.f32 %v286, %v293
    %v295 = vmul.f32 %v294, 1.442695
    %v296 = vpow.pop %v295
    %v297 = vsel %vm132, %v296, 0.0
    %298 = vadd.xlane.f32.xlu0 %v297
    %v299 = vpop.xlane.xlu0 %298
    %v300 = vpack.c.bf16 %v296, %v296
    %301 = vrot.lane.b32.xlu0 %v128, 56
    %v302 = vpop.permute.xlu0 %301
    %v304 = vsel %vm132, %v300, 0
    %v307 = vsel %vm194, %v302, 0
    %309 = vmatprep.subr.bf16.mxu0 0
    %310 = vmatpush1.bf16.msra.mxu0 %v307
    %311 = vmatprep.subr.bf16.mxu0 0
    %312 = vmatpush1.bf16.msra.mxu0 0
    %313 = vmatprep.subr.bf16.mxu0 0
    %314 = vmatpush1.bf16.msra.mxu0 0
    %315 = vmatprep.subr.bf16.mxu0 0
    %316 = vmatpush1.bf16.msra.mxu0 0
    %317 = vmatprep.subr.bf16.mxu0 0
    %318 = vmatpush1.bf16.msra.mxu0 0
    %319 = vmatprep.subr.bf16.mxu0 0
    %320 = vmatpush1.bf16.msra.mxu0 0
    %321 = vmatprep.subr.bf16.mxu0 0
    %322 = vmatpush1.bf16.msra.mxu0 0
    %323 = vmatprep.subr.bf16.mxu0 0
    %324 = vmatpush1.bf16.msra.mxu0 0
    %325 = vmatprep.subr.bf16.mxu0 0
    %326 = vmatpush1.bf16.msra.mxu0 0
    %327 = vmatprep.subr.bf16.mxu0 0
    %328 = vmatpush1.bf16.msra.mxu0 0
    %329 = vmatprep.subr.bf16.mxu0 0
    %330 = vmatpush1.bf16.msra.mxu0 0
    %331 = vmatprep.subr.bf16.mxu0 0
    %332 = vmatpush1.bf16.msra.mxu0 0
    %333 = vmatprep.subr.bf16.mxu0 0
    %334 = vmatpush1.bf16.msra.mxu0 0
    %335 = vmatprep.subr.bf16.mxu0 0
    %336 = vmatpush1.bf16.msra.mxu0 0
    %337 = vmatprep.subr.bf16.mxu0 0
    %338 = vmatpush1.bf16.msra.mxu0 0
    %339 = vmatprep.subr.bf16.mxu0 0
    %340 = vmatpush1.bf16.msra.mxu0 0
    %341 = vmatprep.mubr.bf16.mxu0 0
    %342 = vmatmul.mubr.bf16.gmra.mrb[0].mxu0 %v304
    %v343 = vpop.f32.mrb[0].mxu0
    %v344 = vadd.f32 0.0, %v343
    %v345 = vpop.f32.mrb[0].mxu0
    %v346 = vpop.f32.mrb[0].mxu0
    %v347 = vpop.f32.mrb[0].mxu0
    %348 = vdwg.mxu0
    %v349 = vrcp.pop %v299
    %v350 = vmul.f32 %v344, %v349
    %352 = vrot.lane.b32.xlu0 %v350, 8
    %v353 = vpop.permute.xlu0 %352
    %vm355 = vcmask 130112
    %356 = vst.msk [vmem:[#allocation2] sm:$0xff] %vm355, %v353
    %357 = vrot.lane.b32.xlu0 %v128, 112
    %v358 = vpop.permute.xlu0 %357
    %359 = vrot.lane.b32.xlu0 %v128, 80
    %v360 = vpop.permute.xlu0 %359
    %v362 = vsel %vm132, %v358, 0
    %v365 = vsel %vm132, %v360, 0
    %367 = vmatprep.subr.bf16.mxu0 0
    %368 = vmatpush1.bf16.xpose.msra.mxu0 %v365
    %369 = vmatprep.subr.bf16.mxu0 0
    %370 = vmatpush1.bf16.xpose.msra.mxu0 0
    %371 = vmatprep.subr.bf16.mxu0 0
    %372 = vmatpush1.bf16.xpose.msra.mxu0 0
    %373 = vmatprep.subr.bf16.mxu0 0
    %374 = vmatpush1.bf16.xpose.msra.mxu0 0
    %375 = vmatprep.subr.bf16.mxu0 0
    %376 = vmatpush1.bf16.xpose.msra.mxu0 0
    %377 = vmatprep.subr.bf16.mxu0 0
    %378 = vmatpush1.bf16.xpose.msra.mxu0 0
    %379 = vmatprep.subr.bf16.mxu0 0
    %380 = vmatpush1.bf16.xpose.msra.mxu0 0
    %381 = vmatprep.subr.bf16.mxu0 0
    %382 = vmatpush1.bf16.xpose.msra.mxu0 0
    %383 = vmatprep.subr.bf16.mxu0 0
    %384 = vmatpush1.bf16.xpose.msra.mxu0 0
    %385 = vmatprep.subr.bf16.mxu0 0
    %386 = vmatpush1.bf16.xpose.msra.mxu0 0
    %387 = vmatprep.subr.bf16.mxu0 0
    %388 = vmatpush1.bf16.xpose.msra.mxu0 0
    %389 = vmatprep.subr.bf16.mxu0 0
    %390 = vmatpush1.bf16.xpose.msra.mxu0 0
    %391 = vmatprep.subr.bf16.mxu0 0
    %392 = vmatpush1.bf16.xpose.msra.mxu0 0
    %393 = vmatprep.subr.bf16.mxu0 0
    %394 = vmatpush1.bf16.xpose.msra.mxu0 0
    %395 = vmatprep.subr.bf16.mxu0 0
    %396 = vmatpush1.bf16.xpose.msra.mxu0 0
    %397 = vmatprep.subr.bf16.mxu0 0
    %398 = vmatpush1.bf16.xpose.msra.mxu0 0
    %399 = vmatprep.mubr.bf16.mxu0 0
    %400 = vmatmul.mubr.bf16.gmra.mrb[0].mxu0 %v362
    %v401 = vpop.f32.mrb[0].mxu0
    %v402 = vadd.f32 0.0, %v401
    %v403 = vpop.f32.mrb[0].mxu0
    %v404 = vpop.f32.mrb[0].mxu0
    %v405 = vpop.f32.mrb[0].mxu0
    %406 = vdwg.mxu0
    %v407 = vsel %vm132, %v402, -inf
    %408 = vmax.xlane.f32.xlu0 %v407
    %v409 = vpop.xlane.xlu0 %408
    %v410 = vsub.f32 %v402, %v409
    %v411 = vmul.f32 %v410, 1.442695
    %v412 = vpow.pop %v411
    %v413 = vsel %vm132, %v412, 0.0
    %414 = vadd.xlane.f32.xlu0 %v413
    %v415 = vpop.xlane.xlu0 %414
    %v416 = vpack.c.bf16 %v412, %v412
    %417 = vrot.lane.b32.xlu0 %v128, 48
    %v418 = vpop.permute.xlu0 %417
    %v420 = vsel %vm132, %v416, 0
    %v423 = vsel %vm194, %v418, 0
    %425 = vmatprep.subr.bf16.mxu0 0
    %426 = vmatpush1.bf16.msra.mxu0 %v423
    %427 = vmatprep.subr.bf16.mxu0 0
    %428 = vmatpush1.bf16.msra.mxu0 0
    %429 = vmatprep.subr.bf16.mxu0 0
    %430 = vmatpush1.bf16.msra.mxu0 0
    %431 = vmatprep.subr.bf16.mxu0 0
    %432 = vmatpush1.bf16.msra.mxu0 0
    %433 = vmatprep.subr.bf16.mxu0 0
    %434 = vmatpush1.bf16.msra.mxu0 0
    %435 = vmatprep.subr.bf16.mxu0 0
    %436 = vmatpush1.bf16.msra.mxu0 0
    %437 = vmatprep.subr.bf16.mxu0 0
    %438 = vmatpush1.bf16.msra.mxu0 0
    %439 = vmatprep.subr.bf16.mxu0 0
    %440 = vmatpush1.bf16.msra.mxu0 0
    %441 = vmatprep.subr.bf16.mxu0 0
    %442 = vmatpush1.bf16.msra.mxu0 0
    %443 = vmatprep.subr.bf16.mxu0 0
    %444 = vmatpush1.bf16.msra.mxu0 0
    %445 = vmatprep.subr.bf16.mxu0 0
    %446 = vmatpush1.bf16.msra.mxu0 0
    %447 = vmatprep.subr.bf16.mxu0 0
    %448 = vmatpush1.bf16.msra.mxu0 0
    %449 = vmatprep.subr.bf16.mxu0 0
    %450 = vmatpush1.bf16.msra.mxu0 0
    %451 = vmatprep.subr.bf16.mxu0 0
    %452 = vmatpush1.bf16.msra.mxu0 0
    %453 = vmatprep.subr.bf16.mxu0 0
    %454 = vmatpush1.bf16.msra.mxu0 0
    %455 = vmatprep.subr.bf16.mxu0 0
    %456 = vmatpush1.bf16.msra.mxu0 0
    %457 = vmatprep.mubr.bf16.mxu0 0
    %458 = vmatmul.mubr.bf16.gmra.mrb[0].mxu0 %v420
    %v459 = vpop.f32.mrb[0].mxu0
    %v460 = vadd.f32 0.0, %v459
    %v461 = vpop.f32.mrb[0].mxu0
    %v462 = vpop.f32.mrb[0].mxu0
    %v463 = vpop.f32.mrb[0].mxu0
    %464 = vdwg.mxu0
    %v465 = vrcp.pop %v415
    %v466 = vmul.f32 %v460, %v465
    %468 = vrot.lane.b32.xlu0 %v466, 16
    %v469 = vpop.permute.xlu0 %468
    %vm471 = vcmask 195712
    %472 = vst.msk [vmem:[#allocation2] sm:$0xff] %vm471, %v469
    %473 = vrot.lane.b32.xlu0 %v128, 104
    %v474 = vpop.permute.xlu0 %473
    %475 = vrot.lane.b32.xlu0 %v128, 72
    %v476 = vpop.permute.xlu0 %475
    %v478 = vsel %vm132, %v474, 0
    %v481 = vsel %vm132, %v476, 0
    %483 = vmatprep.subr.bf16.mxu0 0
    %484 = vmatpush1.bf16.xpose.msra.mxu0 %v481
    %485 = vmatprep.subr.bf16.mxu0 0
    %486 = vmatpush1.bf16.xpose.msra.mxu0 0
    %487 = vmatprep.subr.bf16.mxu0 0
    %488 = vmatpush1.bf16.xpose.msra.mxu0 0
    %489 = vmatprep.subr.bf16.mxu0 0
    %490 = vmatpush1.bf16.xpose.msra.mxu0 0
    %491 = vmatprep.subr.bf16.mxu0 0
    %492 = vmatpush1.bf16.xpose.msra.mxu0 0
    %493 = vmatprep.subr.bf16.mxu0 0
    %494 = vmatpush1.bf16.xpose.msra.mxu0 0
    %495 = vmatprep.subr.bf16.mxu0 0
    %496 = vmatpush1.bf16.xpose.msra.mxu0 0
    %497 = vmatprep.subr.bf16.mxu0 0
    %498 = vmatpush1.bf16.xpose.msra.mxu0 0
    %499 = vmatprep.subr.bf16.mxu0 0
    %500 = vmatpush1.bf16.xpose.msra.mxu0 0
    %501 = vmatprep.subr.bf16.mxu0 0
    %502 = vmatpush1.bf16.xpose.msra.mxu0 0
    %503 = vmatprep.subr.bf16.mxu0 0
    %504 = vmatpush1.bf16.xpose.msra.mxu0 0
    %505 = vmatprep.subr.bf16.mxu0 0
    %506 = vmatpush1.bf16.xpose.msra.mxu0 0
    %507 = vmatprep.subr.bf16.mxu0 0
    %508 = vmatpush1.bf16.xpose.msra.mxu0 0
    %509 = vmatprep.subr.bf16.mxu0 0
    %510 = vmatpush1.bf16.xpose.msra.mxu0 0
    %511 = vmatprep.subr.bf16.mxu0 0
    %512 = vmatpush1.bf16.xpose.msra.mxu0 0
    %513 = vmatprep.subr.bf16.mxu0 0
    %514 = vmatpush1.bf16.xpose.msra.mxu0 0
    %515 = vmatprep.mubr.bf16.mxu0 0
    %516 = vmatmul.mubr.bf16.gmra.mrb[0].mxu0 %v478
    %v517 = vpop.f32.mrb[0].mxu0
    %v518 = vadd.f32 0.0, %v517
    %v519 = vpop.f32.mrb[0].mxu0
    %v520 = vpop.f32.mrb[0].mxu0
    %v521 = vpop.f32.mrb[0].mxu0
    %522 = vdwg.mxu0
    %v523 = vsel %vm132, %v518, -inf
    %524 = vmax.xlane.f32.xlu0 %v523
    %v525 = vpop.xlane.xlu0 %524
    %v526 = vsub.f32 %v518, %v525
    %v527 = vmul.f32 %v526, 1.442695
    %v528 = vpow.pop %v527
    %v529 = vsel %vm132, %v528, 0.0
    %530 = vadd.xlane.f32.xlu0 %v529
    %v531 = vpop.xlane.xlu0 %530
    %v532 = vpack.c.bf16 %v528, %v528
    %533 = vrot.lane.b32.xlu0 %v128, 40
    %v534 = vpop.permute.xlu0 %533
    %v536 = vsel %vm132, %v532, 0
    %v539 = vsel %vm194, %v534, 0
    %541 = vmatprep.subr.bf16.mxu0 0
    %542 = vmatpush1.bf16.msra.mxu0 %v539
    %543 = vmatprep.subr.bf16.mxu0 0
    %544 = vmatpush1.bf16.msra.mxu0 0
    %545 = vmatprep.subr.bf16.mxu0 0
    %546 = vmatpush1.bf16.msra.mxu0 0
    %547 = vmatprep.subr.bf16.mxu0 0
    %548 = vmatpush1.bf16.msra.mxu0 0
    %549 = vmatprep.subr.bf16.mxu0 0
    %550 = vmatpush1.bf16.msra.mxu0 0
    %551 = vmatprep.subr.bf16.mxu0 0
    %552 = vmatpush1.bf16.msra.mxu0 0
    %553 = vmatprep.subr.bf16.mxu0 0
    %554 = vmatpush1.bf16.msra.mxu0 0
    %555 = vmatprep.subr.bf16.mxu0 0
    %556 = vmatpush1.bf16.msra.mxu0 0
    %557 = vmatprep.subr.bf16.mxu0 0
    %558 = vmatpush1.bf16.msra.mxu0 0
    %559 = vmatprep.subr.bf16.mxu0 0
    %560 = vmatpush1.bf16.msra.mxu0 0
    %561 = vmatprep.subr.bf16.mxu0 0
    %562 = vmatpush1.bf16.msra.mxu0 0
    %563 = vmatprep.subr.bf16.mxu0 0
    %564 = vmatpush1.bf16.msra.mxu0 0
    %565 = vmatprep.subr.bf16.mxu0 0
    %566 = vmatpush1.bf16.msra.mxu0 0
    %567 = vmatprep.subr.bf16.mxu0 0
    %568 = vmatpush1.bf16.msra.mxu0 0
    %569 = vmatprep.subr.bf16.mxu0 0
    %570 = vmatpush1.bf16.msra.mxu0 0
    %571 = vmatprep.subr.bf16.mxu0 0
    %572 = vmatpush1.bf16.msra.mxu0 0
    %573 = vmatprep.mubr.bf16.mxu0 0
    %574 = vmatmul.mubr.bf16.gmra.mrb[0].mxu0 %v536
    %v575 = vpop.f32.mrb[0].mxu0
    %v576 = vadd.f32 0.0, %v575
    %v577 = vpop.f32.mrb[0].mxu0
    %v578 = vpop.f32.mrb[0].mxu0
    %v579 = vpop.f32.mrb[0].mxu0
    %580 = vdwg.mxu0
    %v581 = vrcp.pop %v531
    %v582 = vmul.f32 %v576, %v581
    %584 = vrot.lane.b32.xlu0 %v582, 24
    %v585 = vpop.permute.xlu0 %584
    %vm587 = vcmask 261312
    %588 = vst.msk [vmem:[#allocation2] sm:$0xff] %vm587, %v585
    %v589 = vrot.slane %v128, 4
    %590 = vrot.lane.b32.xlu0 %v589, 96
    %v591 = vpop.permute.xlu0 %590
    %v593 = vsel %vm132, %v589, 0
    %v596 = vsel %vm132, %v591, 0
    %598 = vmatprep.subr.bf16.mxu0 0
    %599 = vmatpush1.bf16.xpose.msra.mxu0 %v596
    %600 = vmatprep.subr.bf16.mxu0 0
    %601 = vmatpush1.bf16.xpose.msra.mxu0 0
    %602 = vmatprep.subr.bf16.mxu0 0
    %603 = vmatpush1.bf16.xpose.msra.mxu0 0
    %604 = vmatprep.subr.bf16.mxu0 0
    %605 = vmatpush1.bf16.xpose.msra.mxu0 0
    %606 = vmatprep.subr.bf16.mxu0 0
    %607 = vmatpush1.bf16.xpose.msra.mxu0 0
    %608 = vmatprep.subr.bf16.mxu0 0
    %609 = vmatpush1.bf16.xpose.msra.mxu0 0
    %610 = vmatprep.subr.bf16.mxu0 0
    %611 = vmatpush1.bf16.xpose.msra.mxu0 0
    %612 = vmatprep.subr.bf16.mxu0 0
    %613 = vmatpush1.bf16.xpose.msra.mxu0 0
    %614 = vmatprep.subr.bf16.mxu0 0
    %615 = vmatpush1.bf16.xpose.msra.mxu0 0
    %616 = vmatprep.subr.bf16.mxu0 0
    %617 = vmatpush1.bf16.xpose.msra.mxu0 0
    %618 = vmatprep.subr.bf16.mxu0 0
    %619 = vmatpush1.bf16.xpose.msra.mxu0 0
    %620 = vmatprep.subr.bf16.mxu0 0
    %621 = vmatpush1.bf16.xpose.msra.mxu0 0
    %622 = vmatprep.subr.bf16.mxu0 0
    %623 = vmatpush1.bf16.xpose.msra.mxu0 0
    %624 = vmatprep.subr.bf16.mxu0 0
    %625 = vmatpush1.bf16.xpose.msra.mxu0 0
    %626 = vmatprep.subr.bf16.mxu0 0
    %627 = vmatpush1.bf16.xpose.msra.mxu0 0
    %628 = vmatprep.subr.bf16.mxu0 0
    %629 = vmatpush1.bf16.xpose.msra.mxu0 0
    %630 = vmatprep.mubr.bf16.mxu0 0
    %631 = vmatmul.mubr.bf16.gmra.mrb[0].mxu0 %v593
    %v632 = vpop.f32.mrb[0].mxu0
    %v633 = vadd.f32 0.0, %v632
    %v634 = vpop.f32.mrb[0].mxu0
    %v635 = vpop.f32.mrb[0].mxu0
    %v636 = vpop.f32.mrb[0].mxu0
    %637 = vdwg.mxu0
    %v638 = vsel %vm132, %v633, -inf
    %639 = vmax.xlane.f32.xlu0 %v638
    %v640 = vpop.xlane.xlu0 %639
    %v641 = vsub.f32 %v633, %v640
    %v642 = vmul.f32 %v641, 1.442695
    %v643 = vpow.pop %v642
    %v644 = vsel %vm132, %v643, 0.0
    %645 = vadd.xlane.f32.xlu0 %v644
    %v646 = vpop.xlane.xlu0 %645
    %v647 = vpack.c.bf16 %v643, %v643
    %648 = vrot.lane.b32.xlu0 %v589, 64
    %v649 = vpop.permute.xlu0 %648
    %v651 = vsel %vm132, %v647, 0
    %v654 = vsel %vm194, %v649, 0
    %656 = vmatprep.subr.bf16.mxu0 0
    %657 = vmatpush1.bf16.msra.mxu0 %v654
    %658 = vmatprep.subr.bf16.mxu0 0
    %659 = vmatpush1.bf16.msra.mxu0 0
    %660 = vmatprep.subr.bf16.mxu0 0
    %661 = vmatpush1.bf16.msra.mxu0 0
    %662 = vmatprep.subr.bf16.mxu0 0
    %663 = vmatpush1.bf16.msra.mxu0 0
    %664 = vmatprep.subr.bf16.mxu0 0
    %665 = vmatpush1.bf16.msra.mxu0 0
    %666 = vmatprep.subr.bf16.mxu0 0
    %667 = vmatpush1.bf16.msra.mxu0 0
    %668 = vmatprep.subr.bf16.mxu0 0
    %669 = vmatpush1.bf16.msra.mxu0 0
    %670 = vmatprep.subr.bf16.mxu0 0
    %671 = vmatpush1.bf16.msra.mxu0 0
    %672 = vmatprep.subr.bf16.mxu0 0
    %673 = vmatpush1.bf16.msra.mxu0 0
    %674 = vmatprep.subr.bf16.mxu0 0
    %675 = vmatpush1.bf16.msra.mxu0 0
    %676 = vmatprep.subr.bf16.mxu0 0
    %677 = vmatpush1.bf16.msra.mxu0 0
    %678 = vmatprep.subr.bf16.mxu0 0
    %679 = vmatpush1.bf16.msra.mxu0 0
    %680 = vmatprep.subr.bf16.mxu0 0
    %681 = vmatpush1.bf16.msra.mxu0 0
    %682 = vmatprep.subr.bf16.mxu0 0
    %683 = vmatpush1.bf16.msra.mxu0 0
    %684 = vmatprep.subr.bf16.mxu0 0
    %685 = vmatpush1.bf16.msra.mxu0 0
    %686 = vmatprep.subr.bf16.mxu0 0
    %687 = vmatpush1.bf16.msra.mxu0 0
    %688 = vmatprep.mubr.bf16.mxu0 0
    %689 = vmatmul.mubr.bf16.gmra.mrb[0].mxu0 %v651
    %v690 = vpop.f32.mrb[0].mxu0
    %v691 = vadd.f32 0.0, %v690
    %v692 = vpop.f32.mrb[0].mxu0
    %v693 = vpop.f32.mrb[0].mxu0
    %v694 = vpop.f32.mrb[0].mxu0
    %695 = vdwg.mxu0
    %v696 = vrcp.pop %v646
    %v697 = vmul.f32 %v691, %v696
    %698 = vst.msk [vmem:[#allocation2 + $0x8] sm:$0xff] %vm132, %v697
    %699 = vrot.lane.b32.xlu0 %v589, 120
    %v700 = vpop.permute.xlu0 %699
    %701 = vrot.lane.b32.xlu0 %v589, 88
    %v702 = vpop.permute.xlu0 %701
    %v704 = vsel %vm132, %v700, 0
    %v707 = vsel %vm132, %v702, 0
    %709 = vmatprep.subr.bf16.mxu0 0
    %710 = vmatpush1.bf16.xpose.msra.mxu0 %v707
    %711 = vmatprep.subr.bf16.mxu0 0
    %712 = vmatpush1.bf16.xpose.msra.mxu0 0
    %713 = vmatprep.subr.bf16.mxu0 0
    %714 = vmatpush1.bf16.xpose.msra.mxu0 0
    %715 = vmatprep.subr.bf16.mxu0 0
    %716 = vmatpush1.bf16.xpose.msra.mxu0 0
    %717 = vmatprep.subr.bf16.mxu0 0
    %718 = vmatpush1.bf16.xpose.msra.mxu0 0
    %719 = vmatprep.subr.bf16.mxu0 0
    %720 = vmatpush1.bf16.xpose.msra.mxu0 0
    %721 = vmatprep.subr.bf16.mxu0 0
    %722 = vmatpush1.bf16.xpose.msra.mxu0 0
    %723 = vmatprep.subr.bf16.mxu0 0
    %724 = vmatpush1.bf16.xpose.msra.mxu0 0
    %725 = vmatprep.subr.bf16.mxu0 0
    %726 = vmatpush1.bf16.xpose.msra.mxu0 0
    %727 = vmatprep.subr.bf16.mxu0 0
    %728 = vmatpush1.bf16.xpose.msra.mxu0 0
    %729 = vmatprep.subr.bf16.mxu0 0
    %730 = vmatpush1.bf16.xpose.msra.mxu0 0
    %731 = vmatprep.subr.bf16.mxu0 0
    %732 = vmatpush1.bf16.xpose.msra.mxu0 0
    %733 = vmatprep.subr.bf16.mxu0 0
    %734 = vmatpush1.bf16.xpose.msra.mxu0 0
    %735 = vmatprep.subr.bf16.mxu0 0
    %736 = vmatpush1.bf16.xpose.msra.mxu0 0
    %737 = vmatprep.subr.bf16.mxu0 0
    %738 = vmatpush1.bf16.xpose.msra.mxu0 0
    %739 = vmatprep.subr.bf16.mxu0 0
    %740 = vmatpush1.bf16.xpose.msra.mxu0 0
    %741 = vmatprep.mubr.bf16.mxu0 0
    %742 = vmatmul.mubr.bf16.gmra.mrb[0].mxu0 %v704
    %v743 = vpop.f32.mrb[0].mxu0
    %v744 = vadd.f32 0.0, %v743
    %v745 = vpop.f32.mrb[0].mxu0
    %v746 = vpop.f32.mrb[0].mxu0
    %v747 = vpop.f32.mrb[0].mxu0
    %748 = vdwg.mxu0
    %v749 = vsel %vm132, %v744, -inf
    %750 = vmax.xlane.f32.xlu0 %v749
    %v751 = vpop.xlane.xlu0 %750
    %v752 = vsub.f32 %v744, %v751
    %v753 = vmul.f32 %v752, 1.442695
    %v754 = vpow.pop %v753
    %v755 = vsel %vm132, %v754, 0.0
    %756 = vadd.xlane.f32.xlu0 %v755
    %v757 = vpop.xlane.xlu0 %756
    %v758 = vpack.c.bf16 %v754, %v754
    %759 = vrot.lane.b32.xlu0 %v589, 56
    %v760 = vpop.permute.xlu0 %759
    %v762 = vsel %vm132, %v758, 0
    %v765 = vsel %vm194, %v760, 0
    %767 = vmatprep.subr.bf16.mxu0 0
    %768 = vmatpush1.bf16.msra.mxu0 %v765
    %769 = vmatprep.subr.bf16.mxu0 0
    %770 = vmatpush1.bf16.msra.mxu0 0
    %771 = vmatprep.subr.bf16.mxu0 0
    %772 = vmatpush1.bf16.msra.mxu0 0
    %773 = vmatprep.subr.bf16.mxu0 0
    %774 = vmatpush1.bf16.msra.mxu0 0
    %775 = vmatprep.subr.bf16.mxu0 0
    %776 = vmatpush1.bf16.msra.mxu0 0
    %777 = vmatprep.subr.bf16.mxu0 0
    %778 = vmatpush1.bf16.msra.mxu0 0
    %779 = vmatprep.subr.bf16.mxu0 0
    %780 = vmatpush1.bf16.msra.mxu0 0
    %781 = vmatprep.subr.bf16.mxu0 0
    %782 = vmatpush1.bf16.msra.mxu0 0
    %783 = vmatprep.subr.bf16.mxu0 0
    %784 = vmatpush1.bf16.msra.mxu0 0
    %785 = vmatprep.subr.bf16.mxu0 0
    %786 = vmatpush1.bf16.msra.mxu0 0
    %787 = vmatprep.subr.bf16.mxu0 0
    %788 = vmatpush1.bf16.msra.mxu0 0
    %789 = vmatprep.subr.bf16.mxu0 0
    %790 = vmatpush1.bf16.msra.mxu0 0
    %791 = vmatprep.subr.bf16.mxu0 0
    %792 = vmatpush1.bf16.msra.mxu0 0
    %793 = vmatprep.subr.bf16.mxu0 0
    %794 = vmatpush1.bf16.msra.mxu0 0
    %795 = vmatprep.subr.bf16.mxu0 0
    %796 = vmatpush1.bf16.msra.mxu0 0
    %797 = vmatprep.subr.bf16.mxu0 0
    %798 = vmatpush1.bf16.msra.mxu0 0
    %799 = vmatprep.mubr.bf16.mxu0 0
    %800 = vmatmul.mubr.bf16.gmra.mrb[0].mxu0 %v762
    %v801 = vpop.f32.mrb[0].mxu0
    %v802 = vadd.f32 0.0, %v801
    %v803 = vpop.f32.mrb[0].mxu0
    %v804 = vpop.f32.mrb[0].mxu0
    %v805 = vpop.f32.mrb[0].mxu0
    %806 = vdwg.mxu0
    %v807 = vrcp.pop %v757
    %v808 = vmul.f32 %v802, %v807
    %810 = vrot.lane.b32.xlu0 %v808, 8
    %v811 = vpop.permute.xlu0 %810
    %813 = vst.msk [vmem:[#allocation2 + $0x8] sm:$0xff] %vm355, %v811
    %814 = vrot.lane.b32.xlu0 %v589, 112
    %v815 = vpop.permute.xlu0 %814
    %816 = vrot.lane.b32.xlu0 %v589, 80
    %v817 = vpop.permute.xlu0 %816
    %v819 = vsel %vm132, %v815, 0
    %v822 = vsel %vm132, %v817, 0
    %824 = vmatprep.subr.bf16.mxu0 0
    %825 = vmatpush1.bf16.xpose.msra.mxu0 %v822
    %826 = vmatprep.subr.bf16.mxu0 0
    %827 = vmatpush1.bf16.xpose.msra.mxu0 0
    %828 = vmatprep.subr.bf16.mxu0 0
    %829 = vmatpush1.bf16.xpose.msra.mxu0 0
    %830 = vmatprep.subr.bf16.mxu0 0
    %831 = vmatpush1.bf16.xpose.msra.mxu0 0
    %832 = vmatprep.subr.bf16.mxu0 0
    %833 = vmatpush1.bf16.xpose.msra.mxu0 0
    %834 = vmatprep.subr.bf16.mxu0 0
    %835 = vmatpush1.bf16.xpose.msra.mxu0 0
    %836 = vmatprep.subr.bf16.mxu0 0
    %837 = vmatpush1.bf16.xpose.msra.mxu0 0
    %838 = vmatprep.subr.bf16.mxu0 0
    %839 = vmatpush1.bf16.xpose.msra.mxu0 0
    %840 = vmatprep.subr.bf16.mxu0 0
    %841 = vmatpush1.bf16.xpose.msra.mxu0 0
    %842 = vmatprep.subr.bf16.mxu0 0
    %843 = vmatpush1.bf16.xpose.msra.mxu0 0
    %844 = vmatprep.subr.bf16.mxu0 0
    %845 = vmatpush1.bf16.xpose.msra.mxu0 0
    %846 = vmatprep.subr.bf16.mxu0 0
    %847 = vmatpush1.bf16.xpose.msra.mxu0 0
    %848 = vmatprep.subr.bf16.mxu0 0
    %849 = vmatpush1.bf16.xpose.msra.mxu0 0
    %850 = vmatprep.subr.bf16.mxu0 0
    %851 = vmatpush1.bf16.xpose.msra.mxu0 0
    %852 = vmatprep.subr.bf16.mxu0 0
    %853 = vmatpush1.bf16.xpose.msra.mxu0 0
    %854 = vmatprep.subr.bf16.mxu0 0
    %855 = vmatpush1.bf16.xpose.msra.mxu0 0
    %856 = vmatprep.mubr.bf16.mxu0 0
    %857 = vmatmul.mubr.bf16.gmra.mrb[0].mxu0 %v819
    %v858 = vpop.f32.mrb[0].mxu0
    %v859 = vadd.f32 0.0, %v858
    %v860 = vpop.f32.mrb[0].mxu0
    %v861 = vpop.f32.mrb[0].mxu0
    %v862 = vpop.f32.mrb[0].mxu0
    %863 = vdwg.mxu0
    %v864 = vsel %vm132, %v859, -inf
    %865 = vmax.xlane.f32.xlu0 %v864
    %v866 = vpop.xlane.xlu0 %865
    %v867 = vsub.f32 %v859, %v866
    %v868 = vmul.f32 %v867, 1.442695
    %v869 = vpow.pop %v868
    %v870 = vsel %vm132, %v869, 0.0
    %871 = vadd.xlane.f32.xlu0 %v870
    %v872 = vpop.xlane.xlu0 %871
    %v873 = vpack.c.bf16 %v869, %v869
    %874 = vrot.lane.b32.xlu0 %v589, 48
    %v875 = vpop.permute.xlu0 %874
    %v877 = vsel %vm132, %v873, 0
    %v880 = vsel %vm194, %v875, 0
    %882 = vmatprep.subr.bf16.mxu0 0
    %883 = vmatpush1.bf16.msra.mxu0 %v880
    %884 = vmatprep.subr.bf16.mxu0 0
    %885 = vmatpush1.bf16.msra.mxu0 0
    %886 = vmatprep.subr.bf16.mxu0 0
    %887 = vmatpush1.bf16.msra.mxu0 0
    %888 = vmatprep.subr.bf16.mxu0 0
    %889 = vmatpush1.bf16.msra.mxu0 0
    %890 = vmatprep.subr.bf16.mxu0 0
    %891 = vmatpush1.bf16.msra.mxu0 0
    %892 = vmatprep.subr.bf16.mxu0 0
    %893 = vmatpush1.bf16.msra.mxu0 0
    %894 = vmatprep.subr.bf16.mxu0 0
    %895 = vmatpush1.bf16.msra.mxu0 0
    %896 = vmatprep.subr.bf16.mxu0 0
    %897 = vmatpush1.bf16.msra.mxu0 0
    %898 = vmatprep.subr.bf16.mxu0 0
    %899 = vmatpush1.bf16.msra.mxu0 0
    %900 = vmatprep.subr.bf16.mxu0 0
    %901 = vmatpush1.bf16.msra.mxu0 0
    %902 = vmatprep.subr.bf16.mxu0 0
    %903 = vmatpush1.bf16.msra.mxu0 0
    %904 = vmatprep.subr.bf16.mxu0 0
    %905 = vmatpush1.bf16.msra.mxu0 0
    %906 = vmatprep.subr.bf16.mxu0 0
    %907 = vmatpush1.bf16.msra.mxu0 0
    %908 = vmatprep.subr.bf16.mxu0 0
    %909 = vmatpush1.bf16.msra.mxu0 0
    %910 = vmatprep.subr.bf16.mxu0 0
    %911 = vmatpush1.bf16.msra.mxu0 0
    %912 = vmatprep.subr.bf16.mxu0 0
    %913 = vmatpush1.bf16.msra.mxu0 0
    %914 = vmatprep.mubr.bf16.mxu0 0
    %915 = vmatmul.mubr.bf16.gmra.mrb[0].mxu0 %v877
    %v916 = vpop.f32.mrb[0].mxu0
    %v917 = vadd.f32 0.0, %v916
    %v918 = vpop.f32.mrb[0].mxu0
    %v919 = vpop.f32.mrb[0].mxu0
    %v920 = vpop.f32.mrb[0].mxu0
    %921 = vdwg.mxu0
    %v922 = vrcp.pop %v872
    %v923 = vmul.f32 %v917, %v922
    %925 = vrot.lane.b32.xlu0 %v923, 16
    %v926 = vpop.permute.xlu0 %925
    %928 = vst.msk [vmem:[#allocation2 + $0x8] sm:$0xff] %vm471, %v926
    %929 = vrot.lane.b32.xlu0 %v589, 104
    %v930 = vpop.permute.xlu0 %929
    %931 = vrot.lane.b32.xlu0 %v589, 72
    %v932 = vpop.permute.xlu0 %931
    %v934 = vsel %vm132, %v930, 0
    %v937 = vsel %vm132, %v932, 0
    %939 = vmatprep.subr.bf16.mxu0 0
    %940 = vmatpush1.bf16.xpose.msra.mxu0 %v937
    %941 = vmatprep.subr.bf16.mxu0 0
    %942 = vmatpush1.bf16.xpose.msra.mxu0 0
    %943 = vmatprep.subr.bf16.mxu0 0
    %944 = vmatpush1.bf16.xpose.msra.mxu0 0
    %945 = vmatprep.subr.bf16.mxu0 0
    %946 = vmatpush1.bf16.xpose.msra.mxu0 0
    %947 = vmatprep.subr.bf16.mxu0 0
    %948 = vmatpush1.bf16.xpose.msra.mxu0 0
    %949 = vmatprep.subr.bf16.mxu0 0
    %950 = vmatpush1.bf16.xpose.msra.mxu0 0
    %951 = vmatprep.subr.bf16.mxu0 0
    %952 = vmatpush1.bf16.xpose.msra.mxu0 0
    %953 = vmatprep.subr.bf16.mxu0 0
    %954 = vmatpush1.bf16.xpose.msra.mxu0 0
    %955 = vmatprep.subr.bf16.mxu0 0
    %956 = vmatpush1.bf16.xpose.msra.mxu0 0
    %957 = vmatprep.subr.bf16.mxu0 0
    %958 = vmatpush1.bf16.xpose.msra.mxu0 0
    %959 = vmatprep.subr.bf16.mxu0 0
    %960 = vmatpush1.bf16.xpose.msra.mxu0 0
    %961 = vmatprep.subr.bf16.mxu0 0
    %962 = vmatpush1.bf16.xpose.msra.mxu0 0
    %963 = vmatprep.subr.bf16.mxu0 0
    %964 = vmatpush1.bf16.xpose.msra.mxu0 0
    %965 = vmatprep.subr.bf16.mxu0 0
    %966 = vmatpush1.bf16.xpose.msra.mxu0 0
    %967 = vmatprep.subr.bf16.mxu0 0
    %968 = vmatpush1.bf16.xpose.msra.mxu0 0
    %969 = vmatprep.subr.bf16.mxu0 0
    %970 = vmatpush1.bf16.xpose.msra.mxu0 0
    %971 = vmatprep.mubr.bf16.mxu0 0
    %972 = vmatmul.mubr.bf16.gmra.mrb[0].mxu0 %v934
    %v973 = vpop.f32.mrb[0].mxu0
    %v974 = vadd.f32 0.0, %v973
    %v975 = vpop.f32.mrb[0].mxu0
    %v976 = vpop.f32.mrb[0].mxu0
    %v977 = vpop.f32.mrb[0].mxu0
    %978 = vdwg.mxu0
    %v979 = vsel %vm132, %v974, -inf
    %980 = vmax.xlane.f32.xlu0 %v979
    %v981 = vpop.xlane.xlu0 %980
    %v982 = vsub.f32 %v974, %v981
    %v983 = vmul.f32 %v982, 1.442695
    %v984 = vpow.pop %v983
    %v985 = vsel %vm132, %v984, 0.0
    %986 = vadd.xlane.f32.xlu0 %v985
    %v987 = vpop.xlane.xlu0 %986
    %v988 = vpack.c.bf16 %v984, %v984
    %989 = vrot.lane.b32.xlu0 %v589, 40
    %v990 = vpop.permute.xlu0 %989
    %v992 = vsel %vm132, %v988, 0
    %v995 = vsel %vm194, %v990, 0
    %997 = vmatprep.subr.bf16.mxu0 0
    %998 = vmatpush1.bf16.msra.mxu0 %v995
    %999 = vmatprep.subr.bf16.mxu0 0
    %1000 = vmatpush1.bf16.msra.mxu0 0
    %1001 = vmatprep.subr.bf16.mxu0 0
    %1002 = vmatpush1.bf16.msra.mxu0 0
    %1003 = vmatprep.subr.bf16.mxu0 0
    %1004 = vmatpush1.bf16.msra.mxu0 0
    %1005 = vmatprep.subr.bf16.mxu0 0
    %1006 = vmatpush1.bf16.msra.mxu0 0
    %1007 = vmatprep.subr.bf16.mxu0 0
    %1008 = vmatpush1.bf16.msra.mxu0 0
    %1009 = vmatprep.subr.bf16.mxu0 0
    %1010 = vmatpush1.bf16.msra.mxu0 0
    %1011 = vmatprep.subr.bf16.mxu0 0
    %1012 = vmatpush1.bf16.msra.mxu0 0
    %1013 = vmatprep.subr.bf16.mxu0 0
    %1014 = vmatpush1.bf16.msra.mxu0 0
    %1015 = vmatprep.subr.bf16.mxu0 0
    %1016 = vmatpush1.bf16.msra.mxu0 0
    %1017 = vmatprep.subr.bf16.mxu0 0
    %1018 = vmatpush1.bf16.msra.mxu0 0
    %1019 = vmatprep.subr.bf16.mxu0 0
    %1020 = vmatpush1.bf16.msra.mxu0 0
    %1021 = vmatprep.subr.bf16.mxu0 0
    %1022 = vmatpush1.bf16.msra.mxu0 0
    %1023 = vmatprep.subr.bf16.mxu0 0
    %1024 = vmatpush1.bf16.msra.mxu0 0
    %1025 = vmatprep.subr.bf16.mxu0 0
    %1026 = vmatpush1.bf16.msra.mxu0 0
    %1027 = vmatprep.subr.bf16.mxu0 0
    %1028 = vmatpush1.bf16.msra.mxu0 0
    %1029 = vmatprep.mubr.bf16.mxu0 0
    %1030 = vmatmul.mubr.bf16.gmra.mrb[0].mxu0 %v992
    %v1031 = vpop.f32.mrb[0].mxu0
    %v1032 = vadd.f32 0.0, %v1031
    %v1033 = vpop.f32.mrb[0].mxu0
    %v1034 = vpop.f32.mrb[0].mxu0
    %v1035 = vpop.f32.mrb[0].mxu0
    %1036 = vdwg.mxu0
    %v1037 = vrcp.pop %v987
    %v1038 = vmul.f32 %v1032, %v1037
    %1040 = vrot.lane.b32.xlu0 %v1038, 24
    %v1041 = vpop.permute.xlu0 %1040
    %1043 = vst.msk [vmem:[#allocation2 + $0x8] sm:$0xff] %vm587, %v1041
    %v1044 = vld [vmem:[#allocation2] sm:$0xff]
    %v1045 = vld [vmem:[#allocation2 + $0x8] sm:$0xff]
    %v1046 = vpack.c.bf16 %v1045, %v1044
    %v1047 = vld [vmem:[#allocation8] sm:$0xf]
    %v1048 = vld [vmem:[#allocation8 + $0x4] sm:$0xf]
    %v1049 = vld [vmem:[#allocation8 + $0x8] sm:$0xf]
    %v1050 = vld [vmem:[#allocation8 + $0xc] sm:$0xf]
    %v1051 = vld [vmem:[%s3] sm:$0x1]
    %v1053 = vlaneseq
    %v1054 = vshrl.u32 %v1053, 7
    %v1055 = vsub.s32 0, %v1054
    %v1056 = vrot.slane %v1051, %v1055
    %v1062 = vunpack.c.l.b16 %v1047
    %v1063 = vunpack.c.l.b16 %v1048
    %v1064 = vunpack.c.l.b16 %v1049
    %v1065 = vunpack.c.l.b16 %v1050
    %v1066 = vpack.c.b16 %v1063, %v1062
    %v1067 = vpack.c.b16 %v1065, %v1064
    %v1071 = vsel %vm83, %v1046, 0
    %1073 = vmatprep.subr.bf16.mxu0 0
    %1074 = vmatpush1.bf16.msra.mxu0 %v1066
    %1075 = vmatprep.subr.bf16.mxu0 0
    %1076 = vmatpush1.bf16.msra.mxu0 %v1067
    %1077 = vmatprep.subr.bf16.mxu0 0
    %1078 = vmatpush1.bf16.msra.mxu0 0
    %1079 = vmatprep.subr.bf16.mxu0 0
    %1080 = vmatpush1.bf16.msra.mxu0 0
    %1081 = vmatprep.subr.bf16.mxu0 0
    %1082 = vmatpush1.bf16.msra.mxu0 0
    %1083 = vmatprep.subr.bf16.mxu0 0
    %1084 = vmatpush1.bf16.msra.mxu0 0
    %1085 = vmatprep.subr.bf16.mxu0 0
    %1086 = vmatpush1.bf16.msra.mxu0 0
    %1087 = vmatprep.subr.bf16.mxu0 0
    %1088 = vmatpush1.bf16.msra.mxu0 0
    %1089 = vmatprep.subr.bf16.mxu0 0
    %1090 = vmatpush1.bf16.msra.mxu0 0
    %1091 = vmatprep.subr.bf16.mxu0 0
    %1092 = vmatpush1.bf16.msra.mxu0 0
    %1093 = vmatprep.subr.bf16.mxu0 0
    %1094 = vmatpush1.bf16.msra.mxu0 0
    %1095 = vmatprep.subr.bf16.mxu0 0
    %1096 = vmatpush1.bf16.msra.mxu0 0
    %1097 = vmatprep.subr.bf16.mxu0 0
    %1098 = vmatpush1.bf16.msra.mxu0 0
    %1099 = vmatprep.subr.bf16.mxu0 0
    %1100 = vmatpush1.bf16.msra.mxu0 0
    %1101 = vmatprep.subr.bf16.mxu0 0
    %1102 = vmatpush1.bf16.msra.mxu0 0
    %1103 = vmatprep.subr.bf16.mxu0 0
    %1104 = vmatpush1.bf16.msra.mxu0 0
    %1105 = vmatprep.mubr.bf16.mxu0 0
    %1106 = vmatmul.mubr.bf16.gmra.mrb[0].mxu0 %v1071
    %v1107 = vpop.f32.mrb[0].mxu0
    %v1108 = vadd.f32 %v1056, %v1107
    %v1109 = vpop.f32.mrb[0].mxu0
    %v1110 = vpop.f32.mrb[0].mxu0
    %v1111 = vadd.f32 %v1056, %v1110
    %v1112 = vpop.f32.mrb[0].mxu0
    %1113 = vdwg.mxu0
    %1114 = vst.msk [vmem:[#allocation9] sm:$0xff] %vm83, %v1108
    %1115 = vst.msk [vmem:[#allocation9 + $0x8] sm:$0xff] %vm83, %v1111
    // Predicated region
    $region30: #{tpu_custom_call.1} parent=1 // pred_check
      _
    $region31: #{tpu_custom_call.1} parent=1 // pred_check_branch
      %1117 = sbr.rel (0) target = $region33
    $region32: #{tpu_custom_call.1} parent=1 // pred_region
      %s1119 = ssub.s32 256, 256
      %1120 = vsyncadd [#allocation5], %s1119
      %s1121 = sshll.u32 [#allocation9], 4
      %s1122 = int_to_ptr.vmem [resolvable:$true] %s1121
      %1127 = dma.vmem_to_hbm [thread:$0]  %s1122, 256, %s4, [#allocation5], 128, 128, 8
    $region33: #{tpu_custom_call.1} parent=1 // pred_fallthru
      _
    // Predicated region
    $region34: #{tpu_custom_call.1} parent=1 // pred_check
      _
    $region35: #{tpu_custom_call.1} parent=1 // pred_check_branch
      %1129 = sbr.rel (0) target = $region37
    $region36: #{tpu_custom_call.1} parent=1 // pred_region
      %1130 = dma.done [#allocation5], 256
    $region37: #{tpu_custom_call.1} parent=1 // pred_fallthru
      _
    %1131 = vsyncpa [#allocation4], 1
    %1132 = vsyncpa [#allocation7], 1
    %1133 = vsyncpa [#allocation5], 1

</llo_original>
